<compile_context>
chip_gen: v6e
topology: v6e:2x2x1
jax: 0.10.0
libtpu: 0.0.40
codegen_flags: <defaults>
</compile_context>

<pallas_src>
import functools
import math

import jax
import jax.numpy as jnp
from jax import lax
from jax.experimental import pallas as pl
from jax.experimental.pallas import tpu as pltpu


# ----------------------------------------------------------------------------
# Fused bidirectional GRU layer.
#   x   : (T*N, D)  time-major rows (row = t*N + n), n = batch*channels index
#   out : (T*N, 2H) time-major, [forward | backward] features per row.
# Packed weights (gate column order [r_f r_b | z_f z_b | n_f n_b]):
#   wif/wib (D, 6H)   per-direction input weights scattered into their slots
#   bif/bib (1, 6H)   matching input biases
#   whh     (2H, 6H)  block-diagonal recurrent weights for stacked [h_f | h_b]
#   bhh     (1, 6H)   recurrent biases
# ----------------------------------------------------------------------------
def _bigru_layer_kernel(x_ref, wif_ref, wib_ref, bif_ref, bib_ref,
                        whh_ref, bhh_ref, out_ref, gif_scr, gib_scr,
                        *, N, T, H):
    x = x_ref[...]
    # Hoisted input projection: one big MXU matmul per direction, all timesteps.
    gif_scr[...] = (jnp.dot(x, wif_ref[...], preferred_element_type=jnp.float32)
                    + bif_ref[...])
    gib_scr[...] = (jnp.dot(x, wib_ref[...], preferred_element_type=jnp.float32)
                    + bib_ref[...])

    def step(t, h):                       # h: (N, 2H) = [h_fwd | h_bwd]
        tb = T - 1 - t
        rf = pl.multiple_of(t * N, N)
        rb = pl.multiple_of(tb * N, N)
        # gi_f has zeros in the backward slots (and vice versa) -> add == concat.
        gi = gif_scr[pl.ds(rf, N), :] + gib_scr[pl.ds(rb, N), :]           # (N, 6H)
        gh = (jnp.dot(h, whh_ref[...], preferred_element_type=jnp.float32)
              + bhh_ref[...])                                              # (N, 6H)
        rz = jax.nn.sigmoid(gi[:, :4 * H] + gh[:, :4 * H])
        r = rz[:, :2 * H]                 # [r_f | r_b]
        z = rz[:, 2 * H:]                 # [z_f | z_b]
        n = jnp.tanh(gi[:, 4 * H:] + r * gh[:, 4 * H:])
        h_new = (1.0 - z) * n + z * h     # [h_f_new | h_b_new]
        out_ref[pl.ds(rf, N), 0:H] = h_new[:, 0:H]          # fwd output @ time t
        out_ref[pl.ds(rb, N), H:2 * H] = h_new[:, H:2 * H]  # bwd output @ time tb
        return h_new

    h0 = jnp.zeros((N, 2 * H), jnp.float32)
    lax.fori_loop(0, T, step, h0, unroll=True)


def bigru_layer(x_tm, layer, *, N, T, H):
    M, D = x_tm.shape                     # M = T * N
    G = 6 * H
    kernel = functools.partial(_bigru_layer_kernel, N=N, T=T, H=H)
    return pl.pallas_call(
        kernel,
        out_shape=jax.ShapeDtypeStruct((M, 2 * H), jnp.float32),
        grid=(1,),
        in_specs=[
            pl.BlockSpec((M, D), lambda i: (0, 0)),
            pl.BlockSpec((D, G), lambda i: (0, 0)),
            pl.BlockSpec((D, G), lambda i: (0, 0)),
            pl.BlockSpec((1, G), lambda i: (0, 0)),
            pl.BlockSpec((1, G), lambda i: (0, 0)),
            pl.BlockSpec((2 * H, G), lambda i: (0, 0)),
            pl.BlockSpec((1, G), lambda i: (0, 0)),
        ],
        out_specs=pl.BlockSpec((M, 2 * H), lambda i: (0, 0)),
        scratch_shapes=[pltpu.VMEM((M, G), jnp.float32),
                        pltpu.VMEM((M, G), jnp.float32)],
        compiler_params=pltpu.CompilerParams(dimension_semantics=("arbitrary",)),
    )(x_tm, layer["wif"], layer["wib"], layer["bif"], layer["bib"],
      layer["whh"], layer["bhh"])


# ----------------------------------------------------------------------------
# Fused classifier Linear + torch-exact reshape + CrossEntropyLoss (mean).
# h is time-major (row q = p*N + n); g_ref / cls_ref are precomputed maps giving
# the CE row (group) and base class index for each logits row, reproducing
# classify_result.reshape(B*patch_num, -1) exactly.
# ----------------------------------------------------------------------------
def _classify_ce_kernel(h_ref, wc_ref, bc_ref, g_ref, cls_ref, lab_ref, o_ref):
    M = h_ref.shape[0]
    BP = lab_ref.shape[1]

    logits = (jnp.dot(h_ref[...], wc_ref[...], preferred_element_type=jnp.float32)
              + bc_ref[...])                                  # (M, 2), VMEM only
    l0 = logits[:, 0:1]
    l1 = logits[:, 1:2]
    mx = jnp.maximum(l0, l1)
    s = mx + jnp.log(jnp.exp(l0 - mx) + jnp.exp(l1 - mx))     # per-row pair LSE

    rcol = lax.broadcasted_iota(jnp.int32, (M, BP), 1)        # CE row id on lanes
    grp = g_ref[...] == rcol                                  # (M, BP) membership

    ms = jnp.where(grp, s, -jnp.inf)
    gmax = jnp.max(ms, axis=0, keepdims=True)                 # (1, BP)
    gsum = jnp.sum(jnp.exp(ms - gmax), axis=0, keepdims=True)
    lse = gmax + jnp.log(gsum)                                # (1, BP) group LSE

    lab = lab_ref[...]                                        # (1, BP) int32
    pick0 = jnp.logical_and(grp, cls_ref[...] == lab)
    pick1 = jnp.logical_and(grp, cls_ref[...] + 1 == lab)
    picked = jnp.sum(jnp.where(pick0, l0, 0.0) + jnp.where(pick1, l1, 0.0),
                     axis=0, keepdims=True)                   # (1, BP)

    loss = jnp.sum(lse - picked) / BP
    o_ref[...] = loss.reshape(1, 1)


def classify_ce(h_tm, wc_t, bc, g_map, cls_map, labels):
    M, HH = h_tm.shape
    BP = labels.shape[1]
    return pl.pallas_call(
        _classify_ce_kernel,
        out_shape=jax.ShapeDtypeStruct((1, 1), jnp.float32),
        grid=(1,),
        in_specs=[
            pl.BlockSpec((M, HH), lambda i: (0, 0)),
            pl.BlockSpec((HH, 2), lambda i: (0, 0)),
            pl.BlockSpec((1, 2), lambda i: (0, 0)),
            pl.BlockSpec((M, 1), lambda i: (0, 0)),
            pl.BlockSpec((M, 1), lambda i: (0, 0)),
            pl.BlockSpec((1, BP), lambda i: (0, 0)),
        ],
        out_specs=pl.BlockSpec((1, 1), lambda i: (0, 0)),
        compiler_params=pltpu.CompilerParams(dimension_semantics=("arbitrary",)),
    )(h_tm, wc_t, bc, g_map, cls_map, labels)


# ----------------------------------------------------------------------------
# Parameter init (PyTorch GRU / Linear layouts) + packing into the fused layout.
# ----------------------------------------------------------------------------
def _scatter_gate_cols(w3h, slots, H):
    """(rows, 3H) with gate blocks [r|z|n] -> (rows, 6H) scattered into `slots`."""
    out = jnp.zeros((w3h.shape[0], 6 * H), jnp.float32)
    for g in range(3):
        out = out.at[:, slots[g]:slots[g] + H].set(w3h[:, g * H:(g + 1) * H])
    return out


def _pack_bigru_layer(dirs, H):
    (wih_f, whh_f, bih_f, bhh_f), (wih_b, whh_b, bih_b, bhh_b) = dirs
    f_slots = (0, 2 * H, 4 * H)
    b_slots = (H, 3 * H, 5 * H)
    wif = _scatter_gate_cols(wih_f.T, f_slots, H)
    wib = _scatter_gate_cols(wih_b.T, b_slots, H)
    bif = _scatter_gate_cols(bih_f[None, :], f_slots, H)
    bib = _scatter_gate_cols(bih_b[None, :], b_slots, H)
    whh = jnp.zeros((2 * H, 6 * H), jnp.float32)
    whh = whh.at[0:H, :].set(_scatter_gate_cols(whh_f.T, f_slots, H))
    whh = whh.at[H:2 * H, :].set(_scatter_gate_cols(whh_b.T, b_slots, H))
    bhh = (_scatter_gate_cols(bhh_f[None, :], f_slots, H)
           + _scatter_gate_cols(bhh_b[None, :], b_slots, H))
    return dict(wif=wif, wib=wib, bif=bif, bib=bib, whh=whh, bhh=bhh)


def init_params(key, patch_size, expansion_ratio, num_layers):
    H = expansion_ratio * patch_size
    params = {"H": H, "layers": []}
    k_gru = 1.0 / math.sqrt(H)

    def unif(k, shape, scale):
        return jax.random.uniform(k, shape, jnp.float32, -scale, scale)

    for layer in range(num_layers):
        d_in = patch_size if layer == 0 else 2 * H
        dirs = []
        for _direction in range(2):
            key, k1, k2, k3, k4 = jax.random.split(key, 5)
            wih = unif(k1, (3 * H, d_in), k_gru)     # PyTorch weight_ih layout
            whh = unif(k2, (3 * H, H), k_gru)        # PyTorch weight_hh layout
            bih = unif(k3, (3 * H,), k_gru)
            bhh = unif(k4, (3 * H,), k_gru)
            dirs.append((wih, whh, bih, bhh))
        params["layers"].append(_pack_bigru_layer(dirs, H))

    # classifier: Linear(2H, 2), xavier_uniform weight, zero bias
    key, kc = jax.random.split(key)
    limit = math.sqrt(6.0 / (2 * H + 2))
    wc = jax.random.uniform(kc, (2, 2 * H), jnp.float32, -limit, limit)
    params["classifier"] = (wc.T, jnp.zeros((1, 2), jnp.float32))
    # TODO(synk): self.proj (Linear(patch_size, H)) is never used in forward(); skipped.
    return params


# ----------------------------------------------------------------------------
# Forward pass (loss), reproducing PatchClassify.forward.
# ----------------------------------------------------------------------------
def patch_classify_forward(params, x, patch_size):
    """x: (batch, seq_length, num_channels) f32 -> scalar loss."""
    B, S, C = x.shape
    P = S // patch_size
    N = B * C
    H = params["H"]

    # TODO(synk): uniform/scale/jitering distortions via random.choice are external
    # & nondeterministic; the deterministic `original` branch (identity input,
    # all-zero anomaly labels) is reproduced here.
    labels = jnp.zeros((B, S), jnp.float32)

    # permute(0,2,1).reshape(B*C,S).unfold(-1,ps,ps) == (N,P,ps), laid out
    # time-major (row = p*N + n) so each GRU timestep is a contiguous row block.
    x_tm = jnp.transpose(x.reshape(B, P, patch_size, C), (1, 0, 3, 2))
    x_tm = x_tm.reshape(P * N, patch_size)

    patch_labels = (labels.reshape(B, P, patch_size).sum(axis=-1) > 0)
    patch_labels = patch_labels.astype(jnp.int32).reshape(1, B * P)

    h = x_tm
    for layer in params["layers"]:
        h = bigru_layer(h, layer, N=N, T=P, H=H)     # (P*N, 2H)
        # TODO(synk): inter-layer GRU dropout(p=0.1) omitted (deterministic run).

    # Index maps reproducing torch's classify_result.reshape(B*patch_num, -1):
    # time-major row q = p*N + n  ->  n-major flat index m = n*P + p; the CE row
    # is m // C and the class column inside that row is 2*(m % C) + {0, 1}.
    q = jnp.arange(P * N, dtype=jnp.int32)
    p_idx = q // N
    n_idx = q % N
    m_idx = n_idx * P + p_idx
    g_map = (m_idx // C).reshape(P * N, 1)
    cls_map = (2 * (m_idx % C)).reshape(P * N, 1)

    wc_t, bc = params["classifier"]
    loss = classify_ce(h, wc_t, bc, g_map, cls_map, patch_labels)   # (1, 1)
    return loss[0, 0]


if __name__ == "__main__":
    patch_size = 8
    expansion_ratio = 4      # hidden = 32
    num_layers = 2
    batch, seq_length, num_channels = 2, 64, 4   # patch_num = 8

    key = jax.random.PRNGKey(0)
    key, kx = jax.random.split(key)
    x = jax.random.normal(kx, (batch, seq_length, num_channels), jnp.float32)

    params = init_params(key, patch_size, expansion_ratio, num_layers)

    loss = patch_classify_forward(params, x, patch_size)
    loss = jax.block_until_ready(loss)
    assert jnp.isfinite(loss), f"non-finite loss: {loss}"
    print("KERNEL_OK")
</pallas_src>

<mosaic_0001>
module attributes {stable_mosaic.version = 11 : i64} {
  func.func @_bigru_layer_kernel(%arg0: i32, %arg1: memref<64x8xf32, #tpu.memory_space<vmem>>, %arg2: memref<8x192xf32, #tpu.memory_space<vmem>>, %arg3: memref<8x192xf32, #tpu.memory_space<vmem>>, %arg4: memref<1x192xf32, #tpu.memory_space<vmem>>, %arg5: memref<1x192xf32, #tpu.memory_space<vmem>>, %arg6: memref<64x192xf32, #tpu.memory_space<vmem>>, %arg7: memref<1x192xf32, #tpu.memory_space<vmem>>, %arg8: memref<64x64xf32, #tpu.memory_space<vmem>>, %arg9: memref<64x192xf32, #tpu.memory_space<vmem>>, %arg10: memref<64x192xf32, #tpu.memory_space<vmem>>) attributes {dimension_semantics = [#tpu.dimension_semantics<arbitrary>], iteration_bounds = array<i64: 1>, scalar_prefetch = 0 : i64, scratch_operands = 2 : i64, tpu.core_type = #tpu.core_type<tc>, window_params = [{pipeline_mode = #tpu.pipeline_mode<synchronous>, transform_indices = @transform_0, window_bounds = array<i64: 64, 8>}, {pipeline_mode = #tpu.pipeline_mode<synchronous>, transform_indices = @transform_1, window_bounds = array<i64: 8, 192>}, {pipeline_mode = #tpu.pipeline_mode<synchronous>, transform_indices = @transform_2, window_bounds = array<i64: 8, 192>}, {pipeline_mode = #tpu.pipeline_mode<synchronous>, transform_indices = @transform_3, window_bounds = array<i64: 1, 192>}, {pipeline_mode = #tpu.pipeline_mode<synchronous>, transform_indices = @transform_4, window_bounds = array<i64: 1, 192>}, {pipeline_mode = #tpu.pipeline_mode<synchronous>, transform_indices = @transform_5, window_bounds = array<i64: 64, 192>}, {pipeline_mode = #tpu.pipeline_mode<synchronous>, transform_indices = @transform_6, window_bounds = array<i64: 1, 192>}, {pipeline_mode = #tpu.pipeline_mode<synchronous>, transform_indices = @transform_7, window_bounds = array<i64: 64, 64>}]} {
    %c0 = arith.constant 0 : index
    %c0_0 = arith.constant 0 : index
    %0 = vector.load %arg1[%c0, %c0_0] : memref<64x8xf32, #tpu.memory_space<vmem>>, vector<64x8xf32>
    %c0_1 = arith.constant 0 : index
    %c0_2 = arith.constant 0 : index
    %1 = vector.load %arg2[%c0_1, %c0_2] : memref<8x192xf32, #tpu.memory_space<vmem>>, vector<8x192xf32>
    %cst = arith.constant dense<0.000000e+00> : vector<64x192xf32>
    %2 = tpu.matmul %0, %1, %cst {dimension_numbers = #tpu.dot_dimension_numbers<[1], [0], [0], [1], [0, 0, 1, 1], [], []>} : vector<64x8xf32>, vector<8x192xf32>, vector<64x192xf32> -> vector<64x192xf32>
    %c0_3 = arith.constant 0 : index
    %c0_4 = arith.constant 0 : index
    %3 = vector.load %arg4[%c0_3, %c0_4] : memref<1x192xf32, #tpu.memory_space<vmem>>, vector<1x192xf32>
    %4 = vector.broadcast %3 : vector<1x192xf32> to vector<64x192xf32>
    %5 = arith.addf %2, %4 : vector<64x192xf32>
    %c0_5 = arith.constant 0 : index
    %c0_6 = arith.constant 0 : index
    %6 = vector.load %arg9[%c0_5, %c0_6] : memref<64x192xf32, #tpu.memory_space<vmem>>, vector<64x192xf32>
    tpu.vector_store %arg9[%c0_5, %c0_6], %5 {strides = array<i32>} : memref<64x192xf32, #tpu.memory_space<vmem>>, vector<64x192xf32>,
    %c0_7 = arith.constant 0 : index
    %c0_8 = arith.constant 0 : index
    %7 = vector.load %arg3[%c0_7, %c0_8] : memref<8x192xf32, #tpu.memory_space<vmem>>, vector<8x192xf32>
    %cst_9 = arith.constant dense<0.000000e+00> : vector<64x192xf32>
    %8 = tpu.matmul %0, %7, %cst_9 {dimension_numbers = #tpu.dot_dimension_numbers<[1], [0], [0], [1], [0, 0, 1, 1], [], []>} : vector<64x8xf32>, vector<8x192xf32>, vector<64x192xf32> -> vector<64x192xf32>
    %c0_10 = arith.constant 0 : index
    %c0_11 = arith.constant 0 : index
    %9 = vector.load %arg5[%c0_10, %c0_11] : memref<1x192xf32, #tpu.memory_space<vmem>>, vector<1x192xf32>
    %10 = vector.broadcast %9 : vector<1x192xf32> to vector<64x192xf32>
    %11 = arith.addf %8, %10 : vector<64x192xf32>
    %c0_12 = arith.constant 0 : index
    %c0_13 = arith.constant 0 : index
    %12 = vector.load %arg10[%c0_12, %c0_13] : memref<64x192xf32, #tpu.memory_space<vmem>>, vector<64x192xf32>
    tpu.vector_store %arg10[%c0_12, %c0_13], %11 {strides = array<i32>} : memref<64x192xf32, #tpu.memory_space<vmem>>, vector<64x192xf32>,
    %cst_14 = arith.constant 0.000000e+00 : f32
    %13 = vector.broadcast %cst_14 : f32 to vector<8x64xf32>
    %c0_i32 = arith.constant 0 : i32
    %c7_i32 = arith.constant 7 : i32
    %14 = arith.subi %c7_i32, %c0_i32 : i32
    %c8_i32 = arith.constant 8 : i32
    %15 = arith.muli %c0_i32, %c8_i32 : i32
    %16 = tpu.assume_multiple %15, 8 : i32
    %c8_i32_15 = arith.constant 8 : i32
    %17 = arith.muli %14, %c8_i32_15 : i32
    %18 = tpu.assume_multiple %17, 8 : i32
    %19 = arith.index_cast %16 : i32 to index
    %c0_16 = arith.constant 0 : index
    %20 = vector.load %arg9[%19, %c0_16] : memref<64x192xf32, #tpu.memory_space<vmem>>, vector<8x192xf32>
    %21 = arith.index_cast %18 : i32 to index
    %c0_17 = arith.constant 0 : index
    %22 = vector.load %arg10[%21, %c0_17] : memref<64x192xf32, #tpu.memory_space<vmem>>, vector<8x192xf32>
    %23 = arith.addf %20, %22 : vector<8x192xf32>
    %c0_18 = arith.constant 0 : index
    %c0_19 = arith.constant 0 : index
    %24 = vector.load %arg6[%c0_18, %c0_19] : memref<64x192xf32, #tpu.memory_space<vmem>>, vector<64x192xf32>
    %cst_20 = arith.constant dense<0.000000e+00> : vector<8x192xf32>
    %25 = tpu.matmul %13, %24, %cst_20 {dimension_numbers = #tpu.dot_dimension_numbers<[1], [0], [0], [1], [0, 0, 1, 1], [], []>} : vector<8x64xf32>, vector<64x192xf32>, vector<8x192xf32> -> vector<8x192xf32>
    %c0_21 = arith.constant 0 : index
    %c0_22 = arith.constant 0 : index
    %26 = vector.load %arg7[%c0_21, %c0_22] : memref<1x192xf32, #tpu.memory_space<vmem>>, vector<1x192xf32>
    %27 = vector.broadcast %26 : vector<1x192xf32> to vector<8x192xf32>
    %28 = arith.addf %25, %27 : vector<8x192xf32>
    %29 = vector.extract_strided_slice %23 {offsets = [0, 0], sizes = [8, 128], strides = [1, 1]} : vector<8x192xf32> to vector<8x128xf32>
    %30 = vector.extract_strided_slice %28 {offsets = [0, 0], sizes = [8, 128], strides = [1, 1]} : vector<8x192xf32> to vector<8x128xf32>
    %31 = arith.addf %29, %30 : vector<8x128xf32>
    %32 = arith.negf %31 : vector<8x128xf32>
    %33 = math.exp %32 : vector<8x128xf32>
    %cst_23 = arith.constant 1.000000e+00 : f32
    %34 = vector.broadcast %cst_23 : f32 to vector<8x128xf32>
    %35 = arith.addf %34, %33 : vector<8x128xf32>
    %36 = arith.divf %34, %35 : vector<8x128xf32>
    %37 = vector.extract_strided_slice %36 {offsets = [0, 0], sizes = [8, 64], strides = [1, 1]} : vector<8x128xf32> to vector<8x64xf32>
    %38 = vector.extract_strided_slice %36 {offsets = [0, 64], sizes = [8, 64], strides = [1, 1]} : vector<8x128xf32> to vector<8x64xf32>
    %39 = vector.extract_strided_slice %23 {offsets = [0, 128], sizes = [8, 64], strides = [1, 1]} : vector<8x192xf32> to vector<8x64xf32>
    %40 = vector.extract_strided_slice %28 {offsets = [0, 128], sizes = [8, 64], strides = [1, 1]} : vector<8x192xf32> to vector<8x64xf32>
    %41 = arith.mulf %37, %40 : vector<8x64xf32>
    %42 = arith.addf %39, %41 : vector<8x64xf32>
    %43 = math.tanh %42 : vector<8x64xf32>
    %cst_24 = arith.constant 1.000000e+00 : f32
    %44 = vector.broadcast %cst_24 : f32 to vector<8x64xf32>
    %45 = arith.subf %44, %38 : vector<8x64xf32>
    %46 = arith.mulf %45, %43 : vector<8x64xf32>
    %47 = arith.mulf %38, %13 : vector<8x64xf32>
    %48 = arith.addf %46, %47 : vector<8x64xf32>
    %49 = vector.extract_strided_slice %48 {offsets = [0, 0], sizes = [8, 32], strides = [1, 1]} : vector<8x64xf32> to vector<8x32xf32>
    %50 = arith.index_cast %16 : i32 to index
    %c0_25 = arith.constant 0 : index
    %51 = vector.load %arg8[%50, %c0_25] : memref<64x64xf32, #tpu.memory_space<vmem>>, vector<8x32xf32>
    tpu.vector_store %arg8[%50, %c0_25], %49 {strides = array<i32>} : memref<64x64xf32, #tpu.memory_space<vmem>>, vector<8x32xf32>,
    %52 = vector.extract_strided_slice %48 {offsets = [0, 32], sizes = [8, 32], strides = [1, 1]} : vector<8x64xf32> to vector<8x32xf32>
    %53 = arith.index_cast %18 : i32 to index
    %c32 = arith.constant 32 : index
    %54 = vector.load %arg8[%53, %c32] : memref<64x64xf32, #tpu.memory_space<vmem>>, vector<8x32xf32>
    tpu.vector_store %arg8[%53, %c32], %52 {strides = array<i32>} : memref<64x64xf32, #tpu.memory_space<vmem>>, vector<8x32xf32>,
    %c1_i32 = arith.constant 1 : i32
    %c7_i32_26 = arith.constant 7 : i32
    %55 = arith.subi %c7_i32_26, %c1_i32 : i32
    %c8_i32_27 = arith.constant 8 : i32
    %56 = arith.muli %c1_i32, %c8_i32_27 : i32
    %57 = tpu.assume_multiple %56, 8 : i32
    %c8_i32_28 = arith.constant 8 : i32
    %58 = arith.muli %55, %c8_i32_28 : i32
    %59 = tpu.assume_multiple %58, 8 : i32
    %60 = arith.index_cast %57 : i32 to index
    %c0_29 = arith.constant 0 : index
    %61 = vector.load %arg9[%60, %c0_29] : memref<64x192xf32, #tpu.memory_space<vmem>>, vector<8x192xf32>
    %62 = arith.index_cast %59 : i32 to index
    %c0_30 = arith.constant 0 : index
    %63 = vector.load %arg10[%62, %c0_30] : memref<64x192xf32, #tpu.memory_space<vmem>>, vector<8x192xf32>
    %64 = arith.addf %61, %63 : vector<8x192xf32>
    %c0_31 = arith.constant 0 : index
    %c0_32 = arith.constant 0 : index
    %65 = vector.load %arg6[%c0_31, %c0_32] : memref<64x192xf32, #tpu.memory_space<vmem>>, vector<64x192xf32>
    %cst_33 = arith.constant dense<0.000000e+00> : vector<8x192xf32>
    %66 = tpu.matmul %48, %65, %cst_33 {dimension_numbers = #tpu.dot_dimension_numbers<[1], [0], [0], [1], [0, 0, 1, 1], [], []>} : vector<8x64xf32>, vector<64x192xf32>, vector<8x192xf32> -> vector<8x192xf32>
    %c0_34 = arith.constant 0 : index
    %c0_35 = arith.constant 0 : index
    %67 = vector.load %arg7[%c0_34, %c0_35] : memref<1x192xf32, #tpu.memory_space<vmem>>, vector<1x192xf32>
    %68 = vector.broadcast %67 : vector<1x192xf32> to vector<8x192xf32>
    %69 = arith.addf %66, %68 : vector<8x192xf32>
    %70 = vector.extract_strided_slice %64 {offsets = [0, 0], sizes = [8, 128], strides = [1, 1]} : vector<8x192xf32> to vector<8x128xf32>
    %71 = vector.extract_strided_slice %69 {offsets = [0, 0], sizes = [8, 128], strides = [1, 1]} : vector<8x192xf32> to vector<8x128xf32>
    %72 = arith.addf %70, %71 : vector<8x128xf32>
    %73 = arith.negf %72 : vector<8x128xf32>
    %74 = math.exp %73 : vector<8x128xf32>
    %cst_36 = arith.constant 1.000000e+00 : f32
    %75 = vector.broadcast %cst_36 : f32 to vector<8x128xf32>
    %76 = arith.addf %75, %74 : vector<8x128xf32>
    %77 = arith.divf %75, %76 : vector<8x128xf32>
    %78 = vector.extract_strided_slice %77 {offsets = [0, 0], sizes = [8, 64], strides = [1, 1]} : vector<8x128xf32> to vector<8x64xf32>
    %79 = vector.extract_strided_slice %77 {offsets = [0, 64], sizes = [8, 64], strides = [1, 1]} : vector<8x128xf32> to vector<8x64xf32>
    %80 = vector.extract_strided_slice %64 {offsets = [0, 128], sizes = [8, 64], strides = [1, 1]} : vector<8x192xf32> to vector<8x64xf32>
    %81 = vector.extract_strided_slice %69 {offsets = [0, 128], sizes = [8, 64], strides = [1, 1]} : vector<8x192xf32> to vector<8x64xf32>
    %82 = arith.mulf %78, %81 : vector<8x64xf32>
    %83 = arith.addf %80, %82 : vector<8x64xf32>
    %84 = math.tanh %83 : vector<8x64xf32>
    %cst_37 = arith.constant 1.000000e+00 : f32
    %85 = vector.broadcast %cst_37 : f32 to vector<8x64xf32>
    %86 = arith.subf %85, %79 : vector<8x64xf32>
    %87 = arith.mulf %86, %84 : vector<8x64xf32>
    %88 = arith.mulf %79, %48 : vector<8x64xf32>
    %89 = arith.addf %87, %88 : vector<8x64xf32>
    %90 = vector.extract_strided_slice %89 {offsets = [0, 0], sizes = [8, 32], strides = [1, 1]} : vector<8x64xf32> to vector<8x32xf32>
    %91 = arith.index_cast %57 : i32 to index
    %c0_38 = arith.constant 0 : index
    %92 = vector.load %arg8[%91, %c0_38] : memref<64x64xf32, #tpu.memory_space<vmem>>, vector<8x32xf32>
    tpu.vector_store %arg8[%91, %c0_38], %90 {strides = array<i32>} : memref<64x64xf32, #tpu.memory_space<vmem>>, vector<8x32xf32>,
    %93 = vector.extract_strided_slice %89 {offsets = [0, 32], sizes = [8, 32], strides = [1, 1]} : vector<8x64xf32> to vector<8x32xf32>
    %94 = arith.index_cast %59 : i32 to index
    %c32_39 = arith.constant 32 : index
    %95 = vector.load %arg8[%94, %c32_39] : memref<64x64xf32, #tpu.memory_space<vmem>>, vector<8x32xf32>
    tpu.vector_store %arg8[%94, %c32_39], %93 {strides = array<i32>} : memref<64x64xf32, #tpu.memory_space<vmem>>, vector<8x32xf32>,
    %c2_i32 = arith.constant 2 : i32
    %c7_i32_40 = arith.constant 7 : i32
    %96 = arith.subi %c7_i32_40, %c2_i32 : i32
    %c8_i32_41 = arith.constant 8 : i32
    %97 = arith.muli %c2_i32, %c8_i32_41 : i32
    %98 = tpu.assume_multiple %97, 8 : i32
    %c8_i32_42 = arith.constant 8 : i32
    %99 = arith.muli %96, %c8_i32_42 : i32
    %100 = tpu.assume_multiple %99, 8 : i32
    %101 = arith.index_cast %98 : i32 to index
    %c0_43 = arith.constant 0 : index
    %102 = vector.load %arg9[%101, %c0_43] : memref<64x192xf32, #tpu.memory_space<vmem>>, vector<8x192xf32>
    %103 = arith.index_cast %100 : i32 to index
    %c0_44 = arith.constant 0 : index
    %104 = vector.load %arg10[%103, %c0_44] : memref<64x192xf32, #tpu.memory_space<vmem>>, vector<8x192xf32>
    %105 = arith.addf %102, %104 : vector<8x192xf32>
    %c0_45 = arith.constant 0 : index
    %c0_46 = arith.constant 0 : index
    %106 = vector.load %arg6[%c0_45, %c0_46] : memref<64x192xf32, #tpu.memory_space<vmem>>, vector<64x192xf32>
    %cst_47 = arith.constant dense<0.000000e+00> : vector<8x192xf32>
    %107 = tpu.matmul %89, %106, %cst_47 {dimension_numbers = #tpu.dot_dimension_numbers<[1], [0], [0], [1], [0, 0, 1, 1], [], []>} : vector<8x64xf32>, vector<64x192xf32>, vector<8x192xf32> -> vector<8x192xf32>
    %c0_48 = arith.constant 0 : index
    %c0_49 = arith.constant 0 : index
    %108 = vector.load %arg7[%c0_48, %c0_49] : memref<1x192xf32, #tpu.memory_space<vmem>>, vector<1x192xf32>
    %109 = vector.broadcast %108 : vector<1x192xf32> to vector<8x192xf32>
    %110 = arith.addf %107, %109 : vector<8x192xf32>
    %111 = vector.extract_strided_slice %105 {offsets = [0, 0], sizes = [8, 128], strides = [1, 1]} : vector<8x192xf32> to vector<8x128xf32>
    %112 = vector.extract_strided_slice %110 {offsets = [0, 0], sizes = [8, 128], strides = [1, 1]} : vector<8x192xf32> to vector<8x128xf32>
    %113 = arith.addf %111, %112 : vector<8x128xf32>
    %114 = arith.negf %113 : vector<8x128xf32>
    %115 = math.exp %114 : vector<8x128xf32>
    %cst_50 = arith.constant 1.000000e+00 : f32
    %116 = vector.broadcast %cst_50 : f32 to vector<8x128xf32>
    %117 = arith.addf %116, %115 : vector<8x128xf32>
    %118 = arith.divf %116, %117 : vector<8x128xf32>
    %119 = vector.extract_strided_slice %118 {offsets = [0, 0], sizes = [8, 64], strides = [1, 1]} : vector<8x128xf32> to vector<8x64xf32>
    %120 = vector.extract_strided_slice %118 {offsets = [0, 64], sizes = [8, 64], strides = [1, 1]} : vector<8x128xf32> to vector<8x64xf32>
    %121 = vector.extract_strided_slice %105 {offsets = [0, 128], sizes = [8, 64], strides = [1, 1]} : vector<8x192xf32> to vector<8x64xf32>
    %122 = vector.extract_strided_slice %110 {offsets = [0, 128], sizes = [8, 64], strides = [1, 1]} : vector<8x192xf32> to vector<8x64xf32>
    %123 = arith.mulf %119, %122 : vector<8x64xf32>
    %124 = arith.addf %121, %123 : vector<8x64xf32>
    %125 = math.tanh %124 : vector<8x64xf32>
    %cst_51 = arith.constant 1.000000e+00 : f32
    %126 = vector.broadcast %cst_51 : f32 to vector<8x64xf32>
    %127 = arith.subf %126, %120 : vector<8x64xf32>
    %128 = arith.mulf %127, %125 : vector<8x64xf32>
    %129 = arith.mulf %120, %89 : vector<8x64xf32>
    %130 = arith.addf %128, %129 : vector<8x64xf32>
    %131 = vector.extract_strided_slice %130 {offsets = [0, 0], sizes = [8, 32], strides = [1, 1]} : vector<8x64xf32> to vector<8x32xf32>
    %132 = arith.index_cast %98 : i32 to index
    %c0_52 = arith.constant 0 : index
    %133 = vector.load %arg8[%132, %c0_52] : memref<64x64xf32, #tpu.memory_space<vmem>>, vector<8x32xf32>
    tpu.vector_store %arg8[%132, %c0_52], %131 {strides = array<i32>} : memref<64x64xf32, #tpu.memory_space<vmem>>, vector<8x32xf32>,
    %134 = vector.extract_strided_slice %130 {offsets = [0, 32], sizes = [8, 32], strides = [1, 1]} : vector<8x64xf32> to vector<8x32xf32>
    %135 = arith.index_cast %100 : i32 to index
    %c32_53 = arith.constant 32 : index
    %136 = vector.load %arg8[%135, %c32_53] : memref<64x64xf32, #tpu.memory_space<vmem>>, vector<8x32xf32>
    tpu.vector_store %arg8[%135, %c32_53], %134 {strides = array<i32>} : memref<64x64xf32, #tpu.memory_space<vmem>>, vector<8x32xf32>,
    %c3_i32 = arith.constant 3 : i32
    %c7_i32_54 = arith.constant 7 : i32
    %137 = arith.subi %c7_i32_54, %c3_i32 : i32
    %c8_i32_55 = arith.constant 8 : i32
    %138 = arith.muli %c3_i32, %c8_i32_55 : i32
    %139 = tpu.assume_multiple %138, 8 : i32
    %c8_i32_56 = arith.constant 8 : i32
    %140 = arith.muli %137, %c8_i32_56 : i32
    %141 = tpu.assume_multiple %140, 8 : i32
    %142 = arith.index_cast %139 : i32 to index
    %c0_57 = arith.constant 0 : index
    %143 = vector.load %arg9[%142, %c0_57] : memref<64x192xf32, #tpu.memory_space<vmem>>, vector<8x192xf32>
    %144 = arith.index_cast %141 : i32 to index
    %c0_58 = arith.constant 0 : index
    %145 = vector.load %arg10[%144, %c0_58] : memref<64x192xf32, #tpu.memory_space<vmem>>, vector<8x192xf32>
    %146 = arith.addf %143, %145 : vector<8x192xf32>
    %c0_59 = arith.constant 0 : index
    %c0_60 = arith.constant 0 : index
    %147 = vector.load %arg6[%c0_59, %c0_60] : memref<64x192xf32, #tpu.memory_space<vmem>>, vector<64x192xf32>
    %cst_61 = arith.constant dense<0.000000e+00> : vector<8x192xf32>
    %148 = tpu.matmul %130, %147, %cst_61 {dimension_numbers = #tpu.dot_dimension_numbers<[1], [0], [0], [1], [0, 0, 1, 1], [], []>} : vector<8x64xf32>, vector<64x192xf32>, vector<8x192xf32> -> vector<8x192xf32>
    %c0_62 = arith.constant 0 : index
    %c0_63 = arith.constant 0 : index
    %149 = vector.load %arg7[%c0_62, %c0_63] : memref<1x192xf32, #tpu.memory_space<vmem>>, vector<1x192xf32>
    %150 = vector.broadcast %149 : vector<1x192xf32> to vector<8x192xf32>
    %151 = arith.addf %148, %150 : vector<8x192xf32>
    %152 = vector.extract_strided_slice %146 {offsets = [0, 0], sizes = [8, 128], strides = [1, 1]} : vector<8x192xf32> to vector<8x128xf32>
    %153 = vector.extract_strided_slice %151 {offsets = [0, 0], sizes = [8, 128], strides = [1, 1]} : vector<8x192xf32> to vector<8x128xf32>
    %154 = arith.addf %152, %153 : vector<8x128xf32>
    %155 = arith.negf %154 : vector<8x128xf32>
    %156 = math.exp %155 : vector<8x128xf32>
    %cst_64 = arith.constant 1.000000e+00 : f32
    %157 = vector.broadcast %cst_64 : f32 to vector<8x128xf32>
    %158 = arith.addf %157, %156 : vector<8x128xf32>
    %159 = arith.divf %157, %158 : vector<8x128xf32>
    %160 = vector.extract_strided_slice %159 {offsets = [0, 0], sizes = [8, 64], strides = [1, 1]} : vector<8x128xf32> to vector<8x64xf32>
    %161 = vector.extract_strided_slice %159 {offsets = [0, 64], sizes = [8, 64], strides = [1, 1]} : vector<8x128xf32> to vector<8x64xf32>
    %162 = vector.extract_strided_slice %146 {offsets = [0, 128], sizes = [8, 64], strides = [1, 1]} : vector<8x192xf32> to vector<8x64xf32>
    %163 = vector.extract_strided_slice %151 {offsets = [0, 128], sizes = [8, 64], strides = [1, 1]} : vector<8x192xf32> to vector<8x64xf32>
    %164 = arith.mulf %160, %163 : vector<8x64xf32>
    %165 = arith.addf %162, %164 : vector<8x64xf32>
    %166 = math.tanh %165 : vector<8x64xf32>
    %cst_65 = arith.constant 1.000000e+00 : f32
    %167 = vector.broadcast %cst_65 : f32 to vector<8x64xf32>
    %168 = arith.subf %167, %161 : vector<8x64xf32>
    %169 = arith.mulf %168, %166 : vector<8x64xf32>
    %170 = arith.mulf %161, %130 : vector<8x64xf32>
    %171 = arith.addf %169, %170 : vector<8x64xf32>
    %172 = vector.extract_strided_slice %171 {offsets = [0, 0], sizes = [8, 32], strides = [1, 1]} : vector<8x64xf32> to vector<8x32xf32>
    %173 = arith.index_cast %139 : i32 to index
    %c0_66 = arith.constant 0 : index
    %174 = vector.load %arg8[%173, %c0_66] : memref<64x64xf32, #tpu.memory_space<vmem>>, vector<8x32xf32>
    tpu.vector_store %arg8[%173, %c0_66], %172 {strides = array<i32>} : memref<64x64xf32, #tpu.memory_space<vmem>>, vector<8x32xf32>,
    %175 = vector.extract_strided_slice %171 {offsets = [0, 32], sizes = [8, 32], strides = [1, 1]} : vector<8x64xf32> to vector<8x32xf32>
    %176 = arith.index_cast %141 : i32 to index
    %c32_67 = arith.constant 32 : index
    %177 = vector.load %arg8[%176, %c32_67] : memref<64x64xf32, #tpu.memory_space<vmem>>, vector<8x32xf32>
    tpu.vector_store %arg8[%176, %c32_67], %175 {strides = array<i32>} : memref<64x64xf32, #tpu.memory_space<vmem>>, vector<8x32xf32>,
    %c4_i32 = arith.constant 4 : i32
    %c7_i32_68 = arith.constant 7 : i32
    %178 = arith.subi %c7_i32_68, %c4_i32 : i32
    %c8_i32_69 = arith.constant 8 : i32
    %179 = arith.muli %c4_i32, %c8_i32_69 : i32
    %180 = tpu.assume_multiple %179, 8 : i32
    %c8_i32_70 = arith.constant 8 : i32
    %181 = arith.muli %178, %c8_i32_70 : i32
    %182 = tpu.assume_multiple %181, 8 : i32
    %183 = arith.index_cast %180 : i32 to index
    %c0_71 = arith.constant 0 : index
    %184 = vector.load %arg9[%183, %c0_71] : memref<64x192xf32, #tpu.memory_space<vmem>>, vector<8x192xf32>
    %185 = arith.index_cast %182 : i32 to index
    %c0_72 = arith.constant 0 : index
    %186 = vector.load %arg10[%185, %c0_72] : memref<64x192xf32, #tpu.memory_space<vmem>>, vector<8x192xf32>
    %187 = arith.addf %184, %186 : vector<8x192xf32>
    %c0_73 = arith.constant 0 : index
    %c0_74 = arith.constant 0 : index
    %188 = vector.load %arg6[%c0_73, %c0_74] : memref<64x192xf32, #tpu.memory_space<vmem>>, vector<64x192xf32>
    %cst_75 = arith.constant dense<0.000000e+00> : vector<8x192xf32>
    %189 = tpu.matmul %171, %188, %cst_75 {dimension_numbers = #tpu.dot_dimension_numbers<[1], [0], [0], [1], [0, 0, 1, 1], [], []>} : vector<8x64xf32>, vector<64x192xf32>, vector<8x192xf32> -> vector<8x192xf32>
    %c0_76 = arith.constant 0 : index
    %c0_77 = arith.constant 0 : index
    %190 = vector.load %arg7[%c0_76, %c0_77] : memref<1x192xf32, #tpu.memory_space<vmem>>, vector<1x192xf32>
    %191 = vector.broadcast %190 : vector<1x192xf32> to vector<8x192xf32>
    %192 = arith.addf %189, %191 : vector<8x192xf32>
    %193 = vector.extract_strided_slice %187 {offsets = [0, 0], sizes = [8, 128], strides = [1, 1]} : vector<8x192xf32> to vector<8x128xf32>
    %194 = vector.extract_strided_slice %192 {offsets = [0, 0], sizes = [8, 128], strides = [1, 1]} : vector<8x192xf32> to vector<8x128xf32>
    %195 = arith.addf %193, %194 : vector<8x128xf32>
    %196 = arith.negf %195 : vector<8x128xf32>
    %197 = math.exp %196 : vector<8x128xf32>
    %cst_78 = arith.constant 1.000000e+00 : f32
    %198 = vector.broadcast %cst_78 : f32 to vector<8x128xf32>
    %199 = arith.addf %198, %197 : vector<8x128xf32>
    %200 = arith.divf %198, %199 : vector<8x128xf32>
    %201 = vector.extract_strided_slice %200 {offsets = [0, 0], sizes = [8, 64], strides = [1, 1]} : vector<8x128xf32> to vector<8x64xf32>
    %202 = vector.extract_strided_slice %200 {offsets = [0, 64], sizes = [8, 64], strides = [1, 1]} : vector<8x128xf32> to vector<8x64xf32>
    %203 = vector.extract_strided_slice %187 {offsets = [0, 128], sizes = [8, 64], strides = [1, 1]} : vector<8x192xf32> to vector<8x64xf32>
    %204 = vector.extract_strided_slice %192 {offsets = [0, 128], sizes = [8, 64], strides = [1, 1]} : vector<8x192xf32> to vector<8x64xf32>
    %205 = arith.mulf %201, %204 : vector<8x64xf32>
    %206 = arith.addf %203, %205 : vector<8x64xf32>
    %207 = math.tanh %206 : vector<8x64xf32>
    %cst_79 = arith.constant 1.000000e+00 : f32
    %208 = vector.broadcast %cst_79 : f32 to vector<8x64xf32>
    %209 = arith.subf %208, %202 : vector<8x64xf32>
    %210 = arith.mulf %209, %207 : vector<8x64xf32>
    %211 = arith.mulf %202, %171 : vector<8x64xf32>
    %212 = arith.addf %210, %211 : vector<8x64xf32>
    %213 = vector.extract_strided_slice %212 {offsets = [0, 0], sizes = [8, 32], strides = [1, 1]} : vector<8x64xf32> to vector<8x32xf32>
    %214 = arith.index_cast %180 : i32 to index
    %c0_80 = arith.constant 0 : index
    %215 = vector.load %arg8[%214, %c0_80] : memref<64x64xf32, #tpu.memory_space<vmem>>, vector<8x32xf32>
    tpu.vector_store %arg8[%214, %c0_80], %213 {strides = array<i32>} : memref<64x64xf32, #tpu.memory_space<vmem>>, vector<8x32xf32>,
    %216 = vector.extract_strided_slice %212 {offsets = [0, 32], sizes = [8, 32], strides = [1, 1]} : vector<8x64xf32> to vector<8x32xf32>
    %217 = arith.index_cast %182 : i32 to index
    %c32_81 = arith.constant 32 : index
    %218 = vector.load %arg8[%217, %c32_81] : memref<64x64xf32, #tpu.memory_space<vmem>>, vector<8x32xf32>
    tpu.vector_store %arg8[%217, %c32_81], %216 {strides = array<i32>} : memref<64x64xf32, #tpu.memory_space<vmem>>, vector<8x32xf32>,
    %c5_i32 = arith.constant 5 : i32
    %c7_i32_82 = arith.constant 7 : i32
    %219 = arith.subi %c7_i32_82, %c5_i32 : i32
    %c8_i32_83 = arith.constant 8 : i32
    %220 = arith.muli %c5_i32, %c8_i32_83 : i32
    %221 = tpu.assume_multiple %220, 8 : i32
    %c8_i32_84 = arith.constant 8 : i32
    %222 = arith.muli %219, %c8_i32_84 : i32
    %223 = tpu.assume_multiple %222, 8 : i32
    %224 = arith.index_cast %221 : i32 to index
    %c0_85 = arith.constant 0 : index
    %225 = vector.load %arg9[%224, %c0_85] : memref<64x192xf32, #tpu.memory_space<vmem>>, vector<8x192xf32>
    %226 = arith.index_cast %223 : i32 to index
    %c0_86 = arith.constant 0 : index
    %227 = vector.load %arg10[%226, %c0_86] : memref<64x192xf32, #tpu.memory_space<vmem>>, vector<8x192xf32>
    %228 = arith.addf %225, %227 : vector<8x192xf32>
    %c0_87 = arith.constant 0 : index
    %c0_88 = arith.constant 0 : index
    %229 = vector.load %arg6[%c0_87, %c0_88] : memref<64x192xf32, #tpu.memory_space<vmem>>, vector<64x192xf32>
    %cst_89 = arith.constant dense<0.000000e+00> : vector<8x192xf32>
    %230 = tpu.matmul %212, %229, %cst_89 {dimension_numbers = #tpu.dot_dimension_numbers<[1], [0], [0], [1], [0, 0, 1, 1], [], []>} : vector<8x64xf32>, vector<64x192xf32>, vector<8x192xf32> -> vector<8x192xf32>
    %c0_90 = arith.constant 0 : index
    %c0_91 = arith.constant 0 : index
    %231 = vector.load %arg7[%c0_90, %c0_91] : memref<1x192xf32, #tpu.memory_space<vmem>>, vector<1x192xf32>
    %232 = vector.broadcast %231 : vector<1x192xf32> to vector<8x192xf32>
    %233 = arith.addf %230, %232 : vector<8x192xf32>
    %234 = vector.extract_strided_slice %228 {offsets = [0, 0], sizes = [8, 128], strides = [1, 1]} : vector<8x192xf32> to vector<8x128xf32>
    %235 = vector.extract_strided_slice %233 {offsets = [0, 0], sizes = [8, 128], strides = [1, 1]} : vector<8x192xf32> to vector<8x128xf32>
    %236 = arith.addf %234, %235 : vector<8x128xf32>
    %237 = arith.negf %236 : vector<8x128xf32>
    %238 = math.exp %237 : vector<8x128xf32>
    %cst_92 = arith.constant 1.000000e+00 : f32
    %239 = vector.broadcast %cst_92 : f32 to vector<8x128xf32>
    %240 = arith.addf %239, %238 : vector<8x128xf32>
    %241 = arith.divf %239, %240 : vector<8x128xf32>
    %242 = vector.extract_strided_slice %241 {offsets = [0, 0], sizes = [8, 64], strides = [1, 1]} : vector<8x128xf32> to vector<8x64xf32>
    %243 = vector.extract_strided_slice %241 {offsets = [0, 64], sizes = [8, 64], strides = [1, 1]} : vector<8x128xf32> to vector<8x64xf32>
    %244 = vector.extract_strided_slice %228 {offsets = [0, 128], sizes = [8, 64], strides = [1, 1]} : vector<8x192xf32> to vector<8x64xf32>
    %245 = vector.extract_strided_slice %233 {offsets = [0, 128], sizes = [8, 64], strides = [1, 1]} : vector<8x192xf32> to vector<8x64xf32>
    %246 = arith.mulf %242, %245 : vector<8x64xf32>
    %247 = arith.addf %244, %246 : vector<8x64xf32>
    %248 = math.tanh %247 : vector<8x64xf32>
    %cst_93 = arith.constant 1.000000e+00 : f32
    %249 = vector.broadcast %cst_93 : f32 to vector<8x64xf32>
    %250 = arith.subf %249, %243 : vector<8x64xf32>
    %251 = arith.mulf %250, %248 : vector<8x64xf32>
    %252 = arith.mulf %243, %212 : vector<8x64xf32>
    %253 = arith.addf %251, %252 : vector<8x64xf32>
    %254 = vector.extract_strided_slice %253 {offsets = [0, 0], sizes = [8, 32], strides = [1, 1]} : vector<8x64xf32> to vector<8x32xf32>
    %255 = arith.index_cast %221 : i32 to index
    %c0_94 = arith.constant 0 : index
    %256 = vector.load %arg8[%255, %c0_94] : memref<64x64xf32, #tpu.memory_space<vmem>>, vector<8x32xf32>
    tpu.vector_store %arg8[%255, %c0_94], %254 {strides = array<i32>} : memref<64x64xf32, #tpu.memory_space<vmem>>, vector<8x32xf32>,
    %257 = vector.extract_strided_slice %253 {offsets = [0, 32], sizes = [8, 32], strides = [1, 1]} : vector<8x64xf32> to vector<8x32xf32>
    %258 = arith.index_cast %223 : i32 to index
    %c32_95 = arith.constant 32 : index
    %259 = vector.load %arg8[%258, %c32_95] : memref<64x64xf32, #tpu.memory_space<vmem>>, vector<8x32xf32>
    tpu.vector_store %arg8[%258, %c32_95], %257 {strides = array<i32>} : memref<64x64xf32, #tpu.memory_space<vmem>>, vector<8x32xf32>,
    %c6_i32 = arith.constant 6 : i32
    %c7_i32_96 = arith.constant 7 : i32
    %260 = arith.subi %c7_i32_96, %c6_i32 : i32
    %c8_i32_97 = arith.constant 8 : i32
    %261 = arith.muli %c6_i32, %c8_i32_97 : i32
    %262 = tpu.assume_multiple %261, 8 : i32
    %c8_i32_98 = arith.constant 8 : i32
    %263 = arith.muli %260, %c8_i32_98 : i32
    %264 = tpu.assume_multiple %263, 8 : i32
    %265 = arith.index_cast %262 : i32 to index
    %c0_99 = arith.constant 0 : index
    %266 = vector.load %arg9[%265, %c0_99] : memref<64x192xf32, #tpu.memory_space<vmem>>, vector<8x192xf32>
    %267 = arith.index_cast %264 : i32 to index
    %c0_100 = arith.constant 0 : index
    %268 = vector.load %arg10[%267, %c0_100] : memref<64x192xf32, #tpu.memory_space<vmem>>, vector<8x192xf32>
    %269 = arith.addf %266, %268 : vector<8x192xf32>
    %c0_101 = arith.constant 0 : index
    %c0_102 = arith.constant 0 : index
    %270 = vector.load %arg6[%c0_101, %c0_102] : memref<64x192xf32, #tpu.memory_space<vmem>>, vector<64x192xf32>
    %cst_103 = arith.constant dense<0.000000e+00> : vector<8x192xf32>
    %271 = tpu.matmul %253, %270, %cst_103 {dimension_numbers = #tpu.dot_dimension_numbers<[1], [0], [0], [1], [0, 0, 1, 1], [], []>} : vector<8x64xf32>, vector<64x192xf32>, vector<8x192xf32> -> vector<8x192xf32>
    %c0_104 = arith.constant 0 : index
    %c0_105 = arith.constant 0 : index
    %272 = vector.load %arg7[%c0_104, %c0_105] : memref<1x192xf32, #tpu.memory_space<vmem>>, vector<1x192xf32>
    %273 = vector.broadcast %272 : vector<1x192xf32> to vector<8x192xf32>
    %274 = arith.addf %271, %273 : vector<8x192xf32>
    %275 = vector.extract_strided_slice %269 {offsets = [0, 0], sizes = [8, 128], strides = [1, 1]} : vector<8x192xf32> to vector<8x128xf32>
    %276 = vector.extract_strided_slice %274 {offsets = [0, 0], sizes = [8, 128], strides = [1, 1]} : vector<8x192xf32> to vector<8x128xf32>
    %277 = arith.addf %275, %276 : vector<8x128xf32>
    %278 = arith.negf %277 : vector<8x128xf32>
    %279 = math.exp %278 : vector<8x128xf32>
    %cst_106 = arith.constant 1.000000e+00 : f32
    %280 = vector.broadcast %cst_106 : f32 to vector<8x128xf32>
    %281 = arith.addf %280, %279 : vector<8x128xf32>
    %282 = arith.divf %280, %281 : vector<8x128xf32>
    %283 = vector.extract_strided_slice %282 {offsets = [0, 0], sizes = [8, 64], strides = [1, 1]} : vector<8x128xf32> to vector<8x64xf32>
    %284 = vector.extract_strided_slice %282 {offsets = [0, 64], sizes = [8, 64], strides = [1, 1]} : vector<8x128xf32> to vector<8x64xf32>
    %285 = vector.extract_strided_slice %269 {offsets = [0, 128], sizes = [8, 64], strides = [1, 1]} : vector<8x192xf32> to vector<8x64xf32>
    %286 = vector.extract_strided_slice %274 {offsets = [0, 128], sizes = [8, 64], strides = [1, 1]} : vector<8x192xf32> to vector<8x64xf32>
    %287 = arith.mulf %283, %286 : vector<8x64xf32>
    %288 = arith.addf %285, %287 : vector<8x64xf32>
    %289 = math.tanh %288 : vector<8x64xf32>
    %cst_107 = arith.constant 1.000000e+00 : f32
    %290 = vector.broadcast %cst_107 : f32 to vector<8x64xf32>
    %291 = arith.subf %290, %284 : vector<8x64xf32>
    %292 = arith.mulf %291, %289 : vector<8x64xf32>
    %293 = arith.mulf %284, %253 : vector<8x64xf32>
    %294 = arith.addf %292, %293 : vector<8x64xf32>
    %295 = vector.extract_strided_slice %294 {offsets = [0, 0], sizes = [8, 32], strides = [1, 1]} : vector<8x64xf32> to vector<8x32xf32>
    %296 = arith.index_cast %262 : i32 to index
    %c0_108 = arith.constant 0 : index
    %297 = vector.load %arg8[%296, %c0_108] : memref<64x64xf32, #tpu.memory_space<vmem>>, vector<8x32xf32>
    tpu.vector_store %arg8[%296, %c0_108], %295 {strides = array<i32>} : memref<64x64xf32, #tpu.memory_space<vmem>>, vector<8x32xf32>,
    %298 = vector.extract_strided_slice %294 {offsets = [0, 32], sizes = [8, 32], strides = [1, 1]} : vector<8x64xf32> to vector<8x32xf32>
    %299 = arith.index_cast %264 : i32 to index
    %c32_109 = arith.constant 32 : index
    %300 = vector.load %arg8[%299, %c32_109] : memref<64x64xf32, #tpu.memory_space<vmem>>, vector<8x32xf32>
    tpu.vector_store %arg8[%299, %c32_109], %298 {strides = array<i32>} : memref<64x64xf32, #tpu.memory_space<vmem>>, vector<8x32xf32>,
    %c7_i32_110 = arith.constant 7 : i32
    %c7_i32_111 = arith.constant 7 : i32
    %301 = arith.subi %c7_i32_111, %c7_i32_110 : i32
    %c8_i32_112 = arith.constant 8 : i32
    %302 = arith.muli %c7_i32_110, %c8_i32_112 : i32
    %303 = tpu.assume_multiple %302, 8 : i32
    %c8_i32_113 = arith.constant 8 : i32
    %304 = arith.muli %301, %c8_i32_113 : i32
    %305 = tpu.assume_multiple %304, 8 : i32
    %306 = arith.index_cast %303 : i32 to index
    %c0_114 = arith.constant 0 : index
    %307 = vector.load %arg9[%306, %c0_114] : memref<64x192xf32, #tpu.memory_space<vmem>>, vector<8x192xf32>
    %308 = arith.index_cast %305 : i32 to index
    %c0_115 = arith.constant 0 : index
    %309 = vector.load %arg10[%308, %c0_115] : memref<64x192xf32, #tpu.memory_space<vmem>>, vector<8x192xf32>
    %310 = arith.addf %307, %309 : vector<8x192xf32>
    %c0_116 = arith.constant 0 : index
    %c0_117 = arith.constant 0 : index
    %311 = vector.load %arg6[%c0_116, %c0_117] : memref<64x192xf32, #tpu.memory_space<vmem>>, vector<64x192xf32>
    %cst_118 = arith.constant dense<0.000000e+00> : vector<8x192xf32>
    %312 = tpu.matmul %294, %311, %cst_118 {dimension_numbers = #tpu.dot_dimension_numbers<[1], [0], [0], [1], [0, 0, 1, 1], [], []>} : vector<8x64xf32>, vector<64x192xf32>, vector<8x192xf32> -> vector<8x192xf32>
    %c0_119 = arith.constant 0 : index
    %c0_120 = arith.constant 0 : index
    %313 = vector.load %arg7[%c0_119, %c0_120] : memref<1x192xf32, #tpu.memory_space<vmem>>, vector<1x192xf32>
    %314 = vector.broadcast %313 : vector<1x192xf32> to vector<8x192xf32>
    %315 = arith.addf %312, %314 : vector<8x192xf32>
    %316 = vector.extract_strided_slice %310 {offsets = [0, 0], sizes = [8, 128], strides = [1, 1]} : vector<8x192xf32> to vector<8x128xf32>
    %317 = vector.extract_strided_slice %315 {offsets = [0, 0], sizes = [8, 128], strides = [1, 1]} : vector<8x192xf32> to vector<8x128xf32>
    %318 = arith.addf %316, %317 : vector<8x128xf32>
    %319 = arith.negf %318 : vector<8x128xf32>
    %320 = math.exp %319 : vector<8x128xf32>
    %cst_121 = arith.constant 1.000000e+00 : f32
    %321 = vector.broadcast %cst_121 : f32 to vector<8x128xf32>
    %322 = arith.addf %321, %320 : vector<8x128xf32>
    %323 = arith.divf %321, %322 : vector<8x128xf32>
    %324 = vector.extract_strided_slice %323 {offsets = [0, 0], sizes = [8, 64], strides = [1, 1]} : vector<8x128xf32> to vector<8x64xf32>
    %325 = vector.extract_strided_slice %323 {offsets = [0, 64], sizes = [8, 64], strides = [1, 1]} : vector<8x128xf32> to vector<8x64xf32>
    %326 = vector.extract_strided_slice %310 {offsets = [0, 128], sizes = [8, 64], strides = [1, 1]} : vector<8x192xf32> to vector<8x64xf32>
    %327 = vector.extract_strided_slice %315 {offsets = [0, 128], sizes = [8, 64], strides = [1, 1]} : vector<8x192xf32> to vector<8x64xf32>
    %328 = arith.mulf %324, %327 : vector<8x64xf32>
    %329 = arith.addf %326, %328 : vector<8x64xf32>
    %330 = math.tanh %329 : vector<8x64xf32>
    %cst_122 = arith.constant 1.000000e+00 : f32
    %331 = vector.broadcast %cst_122 : f32 to vector<8x64xf32>
    %332 = arith.subf %331, %325 : vector<8x64xf32>
    %333 = arith.mulf %332, %330 : vector<8x64xf32>
    %334 = arith.mulf %325, %294 : vector<8x64xf32>
    %335 = arith.addf %333, %334 : vector<8x64xf32>
    %336 = vector.extract_strided_slice %335 {offsets = [0, 0], sizes = [8, 32], strides = [1, 1]} : vector<8x64xf32> to vector<8x32xf32>
    %337 = arith.index_cast %303 : i32 to index
    %c0_123 = arith.constant 0 : index
    %338 = vector.load %arg8[%337, %c0_123] : memref<64x64xf32, #tpu.memory_space<vmem>>, vector<8x32xf32>
    tpu.vector_store %arg8[%337, %c0_123], %336 {strides = array<i32>} : memref<64x64xf32, #tpu.memory_space<vmem>>, vector<8x32xf32>,
    %339 = vector.extract_strided_slice %335 {offsets = [0, 32], sizes = [8, 32], strides = [1, 1]} : vector<8x64xf32> to vector<8x32xf32>
    %340 = arith.index_cast %305 : i32 to index
    %c32_124 = arith.constant 32 : index
    %341 = vector.load %arg8[%340, %c32_124] : memref<64x64xf32, #tpu.memory_space<vmem>>, vector<8x32xf32>
    tpu.vector_store %arg8[%340, %c32_124], %339 {strides = array<i32>} : memref<64x64xf32, #tpu.memory_space<vmem>>, vector<8x32xf32>,
    %c8_i32_125 = arith.constant 8 : i32
    return
  }
  func.func @transform_0(%arg0: i32) -> (i32, i32) {
    %c0_i32 = arith.constant 0 : i32
    %c0_i32_0 = arith.constant 0 : i32
    %c0_i32_1 = arith.constant 0 : i32
    return %c0_i32, %c0_i32_0 : i32, i32
  }
  func.func @transform_1(%arg0: i32) -> (i32, i32) {
    %c0_i32 = arith.constant 0 : i32
    %c0_i32_0 = arith.constant 0 : i32
    %c0_i32_1 = arith.constant 0 : i32
    return %c0_i32, %c0_i32_0 : i32, i32
  }
  func.func @transform_2(%arg0: i32) -> (i32, i32) {
    %c0_i32 = arith.constant 0 : i32
    %c0_i32_0 = arith.constant 0 : i32
    %c0_i32_1 = arith.constant 0 : i32
    return %c0_i32, %c0_i32_0 : i32, i32
  }
  func.func @transform_3(%arg0: i32) -> (i32, i32) {
    %c0_i32 = arith.constant 0 : i32
    %c0_i32_0 = arith.constant 0 : i32
    %c0_i32_1 = arith.constant 0 : i32
    return %c0_i32, %c0_i32_0 : i32, i32
  }
  func.func @transform_4(%arg0: i32) -> (i32, i32) {
    %c0_i32 = arith.constant 0 : i32
    %c0_i32_0 = arith.constant 0 : i32
    %c0_i32_1 = arith.constant 0 : i32
    return %c0_i32, %c0_i32_0 : i32, i32
  }
  func.func @transform_5(%arg0: i32) -> (i32, i32) {
    %c0_i32 = arith.constant 0 : i32
    %c0_i32_0 = arith.constant 0 : i32
    %c0_i32_1 = arith.constant 0 : i32
    return %c0_i32, %c0_i32_0 : i32, i32
  }
  func.func @transform_6(%arg0: i32) -> (i32, i32) {
    %c0_i32 = arith.constant 0 : i32
    %c0_i32_0 = arith.constant 0 : i32
    %c0_i32_1 = arith.constant 0 : i32
    return %c0_i32, %c0_i32_0 : i32, i32
  }
  func.func @transform_7(%arg0: i32) -> (i32, i32) {
    %c0_i32 = arith.constant 0 : i32
    %c0_i32_0 = arith.constant 0 : i32
    %c0_i32_1 = arith.constant 0 : i32
    return %c0_i32, %c0_i32_0 : i32, i32
  }
}

</mosaic_0001>

<llo_original>
// kernel: tpu_custom_call.1
$region0: #{tpu_custom_call.1}
  #allocation0 [shape = 'u32[]', space=smem, size = 0x4, offset = 0x4, fixed_abs, tag = 'smem constant byte address 0x4 - core index']
  #allocation1 [shape = 'u32[144,128]{1,0:T(1,128)}', space=vmem, size = 0x12000, scoped, tag = 'internal scratch']
  #allocation2 [shape = 'f32[64,192]{1,0:T(8,128)}', space=vmem, size = 0x10000, scoped, tag = 'scratch operand']
  #allocation3 [shape = 'f32[64,192]{1,0:T(8,128)}', space=vmem, size = 0x10000, scoped, tag = 'scratch operand']
  %s0 = inlined_call_operand.vmem [shape: f32[64,8], index: 0, kind: input, shape index: {}]
  %s1 = inlined_call_operand.vmem [shape: f32[8,192], index: 1, kind: input, shape index: {}]
  %s2 = inlined_call_operand.vmem [shape: f32[8,192], index: 2, kind: input, shape index: {}]
  %s3 = inlined_call_operand.vmem [shape: f32[1,192], index: 3, kind: input, shape index: {}]
  %s4 = inlined_call_operand.vmem [shape: f32[1,192], index: 4, kind: input, shape index: {}]
  %s5 = inlined_call_operand.hbm [shape: f32[64,192], index: 5, kind: input, shape index: {}]
  %s6 = inlined_call_operand.vmem [shape: f32[1,192], index: 6, kind: input, shape index: {}]
  %s7 = inlined_call_operand.hbm [shape: f32[64,64], index: 7, kind: output, shape index: {}]
  %s8 = sld [smem:[#allocation0]]
  $region42: #{tpu_custom_call.1} parent=0
    _
  %s10 = ssub.s32 1, %s8
  %s11 = scalar_select 0, %s10, %s8
  $region1: #{tpu_custom_call.1} parent=0
    #allocation4 [shape = 'u8[65536]{0}', space=vmem, size = 0x10000, scoped, tag = 'input window, operand 5, single buffered']
    #allocation5 [shape = 's32[1]{0}', space=sflag, size = 0x4, scoped, tag = 'scoped memory for tpu_custom_call.1']
    #allocation6 [shape = 's32[1]{0}', space=sflag, size = 0x4, scoped, tag = 'scoped memory for tpu_custom_call.1']
    #allocation7 [shape = 'u8[32768]{0}', space=vmem, size = 0x8000, scoped, tag = 'output window, operand 0, single buffered']
    %12 = vsyncpa [#allocation5], 0
    %13 = vsyncpa [#allocation6], 0
    // Predicated region
    $region2: #{tpu_custom_call.1} parent=1 // pred_check
      _
    $region3: #{tpu_custom_call.1} parent=1 // pred_check_branch
      %15 = sbr.rel (0) target = $region5
    $region4: #{tpu_custom_call.1} parent=1 // pred_region
      _
    $region5: #{tpu_custom_call.1} parent=1 // pred_fallthru
      _
    // Predicated region
    $region6: #{tpu_custom_call.1} parent=1 // pred_check
      _
    $region7: #{tpu_custom_call.1} parent=1 // pred_check_branch
      %17 = sbr.rel (0) target = $region9
    $region8: #{tpu_custom_call.1} parent=1 // pred_region
      _
    $region9: #{tpu_custom_call.1} parent=1 // pred_fallthru
      _
    // Predicated region
    $region10: #{tpu_custom_call.1} parent=1 // pred_check
      _
    $region11: #{tpu_custom_call.1} parent=1 // pred_check_branch
      %19 = sbr.rel (0) target = $region13
    $region12: #{tpu_custom_call.1} parent=1 // pred_region
      _
    $region13: #{tpu_custom_call.1} parent=1 // pred_fallthru
      _
    // Predicated region
    $region14: #{tpu_custom_call.1} parent=1 // pred_check
      _
    $region15: #{tpu_custom_call.1} parent=1 // pred_check_branch
      %21 = sbr.rel (0) target = $region17
    $region16: #{tpu_custom_call.1} parent=1 // pred_region
      _
    $region17: #{tpu_custom_call.1} parent=1 // pred_fallthru
      _
    // Predicated region
    $region18: #{tpu_custom_call.1} parent=1 // pred_check
      _
    $region19: #{tpu_custom_call.1} parent=1 // pred_check_branch
      %23 = sbr.rel (0) target = $region21
    $region20: #{tpu_custom_call.1} parent=1 // pred_region
      _
    $region21: #{tpu_custom_call.1} parent=1 // pred_fallthru
      _
    // Predicated region
    $region22: #{tpu_custom_call.1} parent=1 // pred_check
      _
    $region23: #{tpu_custom_call.1} parent=1 // pred_check_branch
      %25 = sbr.rel (0) target = $region25
    $region24: #{tpu_custom_call.1} parent=1 // pred_region
      %s27 = ssub.s32 2048, 2048
      %28 = vsyncadd [#allocation5], %s27
      %s29 = sshll.u32 [#allocation4], 4
      %s30 = int_to_ptr.vmem [resolvable:$true] %s29
      %35 = dma.hbm_to_vmem [thread:$0]  %s5, 2048, %s30, [#allocation5], 256, 256, 16
    $region25: #{tpu_custom_call.1} parent=1 // pred_fallthru
      _
    // Predicated region
    $region26: #{tpu_custom_call.1} parent=1 // pred_check
      _
    $region27: #{tpu_custom_call.1} parent=1 // pred_check_branch
      %37 = sbr.rel (0) target = $region29
    $region28: #{tpu_custom_call.1} parent=1 // pred_region
      _
    $region29: #{tpu_custom_call.1} parent=1 // pred_fallthru
      _
    // Predicated region
    $region30: #{tpu_custom_call.1} parent=1 // pred_check
      _
    $region31: #{tpu_custom_call.1} parent=1 // pred_check_branch
      %39 = sbr.rel (0) target = $region33
    $region32: #{tpu_custom_call.1} parent=1 // pred_region
      %40 = dma.done [#allocation5], 2048
    $region33: #{tpu_custom_call.1} parent=1 // pred_fallthru
      _
    %v41 = vld [vmem:[%s0] sm:$0xff]
    %v42 = vld [vmem:[%s0 + $0x8] sm:$0xff]
    %v43 = vld [vmem:[%s0 + $0x10] sm:$0xff]
    %v44 = vld [vmem:[%s0 + $0x18] sm:$0xff]
    %v45 = vld [vmem:[%s0 + $0x20] sm:$0xff]
    %v46 = vld [vmem:[%s0 + $0x28] sm:$0xff]
    %v47 = vld [vmem:[%s0 + $0x30] sm:$0xff]
    %v48 = vld [vmem:[%s0 + $0x38] sm:$0xff]
    %v49 = vld [vmem:[%s1] sm:$0xff]
    %v50 = vld [vmem:[%s1 + $0x8] sm:$0xff]
    %v51 = vld [vmem:[%s3] sm:$0x3]
    %v53 = vlaneseq
    %v54 = vshrl.u32 %v53, 7
    %v55 = vsub.s32 0, %v54
    %v56 = vrot.slane %v51, %v55
    %v57 = vlaneseq
    %v58 = vshrl.u32 %v57, 7
    %v59 = vsub.s32 1, %v58
    %v60 = vrot.slane %v51, %v59
    %vm63 = vcmask 64512
    %v65 = vsel %vm63, %v41, 0
    %v68 = vsel %vm63, %v42, 0
    %v71 = vsel %vm63, %v43, 0
    %v74 = vsel %vm63, %v44, 0
    %v77 = vsel %vm63, %v45, 0
    %v80 = vsel %vm63, %v46, 0
    %v83 = vsel %vm63, %v47, 0
    %v86 = vsel %vm63, %v48, 0
    %88 = vmatprep.subr.mxu0 0.0
    %89 = vmatpush1.msra.mxu0 0.0
    %90 = vmatprep.subr.mxu0 0.0
    %91 = vmatpush1.msra.mxu0 0.0
    %92 = vmatprep.subr.mxu0 0.0
    %93 = vmatpush1.msra.mxu0 0.0
    %94 = vmatprep.subr.mxu0 0.0
    %95 = vmatpush1.msra.mxu0 0.0
    %96 = vmatprep.subr.mxu0 0.0
    %97 = vmatpush1.msra.mxu0 0.0
    %98 = vmatprep.subr.mxu0 0.0
    %99 = vmatpush1.msra.mxu0 0.0
    %100 = vmatprep.subr.mxu0 0.0
    %101 = vmatpush1.msra.mxu0 0.0
    %102 = vmatprep.subr.mxu0 0.0
    %103 = vmatpush1.msra.mxu0 0.0
    %104 = vmatprep.subr.mxu0 0.0
    %105 = vmatpush1.msra.mxu0 0.0
    %106 = vmatprep.subr.mxu0 0.0
    %107 = vmatpush1.msra.mxu0 0.0
    %108 = vmatprep.subr.mxu0 0.0
    %109 = vmatpush1.msra.mxu0 0.0
    %110 = vmatprep.subr.mxu0 0.0
    %111 = vmatpush1.msra.mxu0 0.0
    %112 = vmatprep.subr.mxu0 0.0
    %113 = vmatpush1.msra.mxu0 0.0
    %114 = vmatprep.subr.mxu0 0.0
    %115 = vmatpush1.msra.mxu0 0.0
    %116 = vmatprep.subr.mxu0 0.0
    %117 = vmatpush1.msra.mxu0 0.0
    %118 = vmatprep.subr.mxu0 %v50
    %119 = vmatpush1.msra.mxu0 %v49
    %120 = vmatprep.subr.mxu0 0.0
    %121 = vmatpush2.msra.mxu0 0.0
    %122 = vmatprep.subr.mxu0 0.0
    %123 = vmatpush2.msra.mxu0 0.0
    %124 = vmatprep.subr.mxu0 0.0
    %125 = vmatpush2.msra.mxu0 0.0
    %126 = vmatprep.subr.mxu0 0.0
    %127 = vmatpush2.msra.mxu0 0.0
    %128 = vmatprep.subr.mxu0 0.0
    %129 = vmatpush2.msra.mxu0 0.0
    %130 = vmatprep.subr.mxu0 0.0
    %131 = vmatpush2.msra.mxu0 0.0
    %132 = vmatprep.subr.mxu0 0.0
    %133 = vmatpush2.msra.mxu0 0.0
    %134 = vmatprep.subr.mxu0 0.0
    %135 = vmatpush2.msra.mxu0 0.0
    %136 = vmatprep.subr.mxu0 0.0
    %137 = vmatpush2.msra.mxu0 0.0
    %138 = vmatprep.subr.mxu0 0.0
    %139 = vmatpush2.msra.mxu0 0.0
    %140 = vmatprep.subr.mxu0 0.0
    %141 = vmatpush2.msra.mxu0 0.0
    %142 = vmatprep.subr.mxu0 0.0
    %143 = vmatpush2.msra.mxu0 0.0
    %144 = vmatprep.subr.mxu0 0.0
    %145 = vmatpush2.msra.mxu0 0.0
    %146 = vmatprep.subr.mxu0 0.0
    %147 = vmatpush2.msra.mxu0 0.0
    %148 = vmatprep.subr.mxu0 0.0
    %149 = vmatpush2.msra.mxu0 0.0
    %150 = vmatprep.subr.mxu0 0.0
    %151 = vmatpush2.msra.mxu0 0.0
    %152 = vmatprep.mubr.f32.mxu0 0.0
    %153 = vmatmul.mubr.f32.gmra.mxu0 %v65
    %v154 = vpop.f32.mrf.mxu0
    %v155 = vadd.f32 %v56, %v154
    %v156 = vpop.f32.mrf.mxu0
    %v157 = vadd.f32 %v60, %v156
    %158 = vmatprep.mubr.f32.mxu0 0.0
    %159 = vmatmul.mubr.f32.gmra.mxu0 %v68
    %v160 = vpop.f32.mrf.mxu0
    %v161 = vadd.f32 %v56, %v160
    %v162 = vpop.f32.mrf.mxu0
    %v163 = vadd.f32 %v60, %v162
    %164 = vmatprep.mubr.f32.mxu0 0.0
    %165 = vmatmul.mubr.f32.gmra.mxu0 %v71
    %v166 = vpop.f32.mrf.mxu0
    %v167 = vadd.f32 %v56, %v166
    %v168 = vpop.f32.mrf.mxu0
    %v169 = vadd.f32 %v60, %v168
    %170 = vmatprep.mubr.f32.mxu0 0.0
    %171 = vmatmul.mubr.f32.gmra.mxu0 %v74
    %v172 = vpop.f32.mrf.mxu0
    %v173 = vadd.f32 %v56, %v172
    %v174 = vpop.f32.mrf.mxu0
    %v175 = vadd.f32 %v60, %v174
    %176 = vmatprep.mubr.f32.mxu0 0.0
    %177 = vmatmul.mubr.f32.gmra.mxu0 %v77
    %v178 = vpop.f32.mrf.mxu0
    %v179 = vadd.f32 %v56, %v178
    %v180 = vpop.f32.mrf.mxu0
    %v181 = vadd.f32 %v60, %v180
    %182 = vmatprep.mubr.f32.mxu0 0.0
    %183 = vmatmul.mubr.f32.gmra.mxu0 %v80
    %v184 = vpop.f32.mrf.mxu0
    %v185 = vadd.f32 %v56, %v184
    %v186 = vpop.f32.mrf.mxu0
    %v187 = vadd.f32 %v60, %v186
    %188 = vmatprep.mubr.f32.mxu0 0.0
    %189 = vmatmul.mubr.f32.gmra.mxu0 %v83
    %v190 = vpop.f32.mrf.mxu0
    %v191 = vadd.f32 %v56, %v190
    %v192 = vpop.f32.mrf.mxu0
    %v193 = vadd.f32 %v60, %v192
    %194 = vmatprep.mubr.f32.mxu0 0.0
    %195 = vmatmul.mubr.f32.gmra.mxu0 %v86
    %v196 = vpop.f32.mrf.mxu0
    %v197 = vadd.f32 %v56, %v196
    %v198 = vpop.f32.mrf.mxu0
    %v199 = vadd.f32 %v60, %v198
    %200 = vdwg.mxu0
    %201 = vst [vmem:[#allocation2] sm:$0xff] %v155
    %vm202 = vcmask 523264
    %203 = vst.msk [vmem:[#allocation2 + $0x8] sm:$0xff] %vm202, %v157
    %204 = vst [vmem:[#allocation2 + $0x10] sm:$0xff] %v161
    %205 = vst.msk [vmem:[#allocation2 + $0x18] sm:$0xff] %vm202, %v163
    %206 = vst [vmem:[#allocation2 + $0x20] sm:$0xff] %v167
    %207 = vst.msk [vmem:[#allocation2 + $0x28] sm:$0xff] %vm202, %v169
    %208 = vst [vmem:[#allocation2 + $0x30] sm:$0xff] %v173
    %209 = vst.msk [vmem:[#allocation2 + $0x38] sm:$0xff] %vm202, %v175
    %210 = vst [vmem:[#allocation2 + $0x40] sm:$0xff] %v179
    %211 = vst.msk [vmem:[#allocation2 + $0x48] sm:$0xff] %vm202, %v181
    %212 = vst [vmem:[#allocation2 + $0x50] sm:$0xff] %v185
    %213 = vst.msk [vmem:[#allocation2 + $0x58] sm:$0xff] %vm202, %v187
    %214 = vst [vmem:[#allocation2 + $0x60] sm:$0xff] %v191
    %215 = vst.msk [vmem:[#allocation2 + $0x68] sm:$0xff] %vm202, %v193
    %216 = vst [vmem:[#allocation2 + $0x70] sm:$0xff] %v197
    %217 = vst.msk [vmem:[#allocation2 + $0x78] sm:$0xff] %vm202, %v199
    %v218 = vld [vmem:[%s2] sm:$0xff]
    %v219 = vld [vmem:[%s2 + $0x8] sm:$0xff]
    %v220 = vld [vmem:[%s4] sm:$0x3]
    %v222 = vlaneseq
    %v223 = vshrl.u32 %v222, 7
    %v224 = vsub.s32 0, %v223
    %v225 = vrot.slane %v220, %v224
    %v226 = vlaneseq
    %v227 = vshrl.u32 %v226, 7
    %v228 = vsub.s32 1, %v227
    %v229 = vrot.slane %v220, %v228
    %232 = vmatprep.subr.mxu0 0.0
    %233 = vmatpush1.msra.mxu0 0.0
    %234 = vmatprep.subr.mxu0 0.0
    %235 = vmatpush1.msra.mxu0 0.0
    %236 = vmatprep.subr.mxu0 0.0
    %237 = vmatpush1.msra.mxu0 0.0
    %238 = vmatprep.subr.mxu0 0.0
    %239 = vmatpush1.msra.mxu0 0.0
    %240 = vmatprep.subr.mxu0 0.0
    %241 = vmatpush1.msra.mxu0 0.0
    %242 = vmatprep.subr.mxu0 0.0
    %243 = vmatpush1.msra.mxu0 0.0
    %244 = vmatprep.subr.mxu0 0.0
    %245 = vmatpush1.msra.mxu0 0.0
    %246 = vmatprep.subr.mxu0 0.0
    %247 = vmatpush1.msra.mxu0 0.0
    %248 = vmatprep.subr.mxu0 0.0
    %249 = vmatpush1.msra.mxu0 0.0
    %250 = vmatprep.subr.mxu0 0.0
    %251 = vmatpush1.msra.mxu0 0.0
    %252 = vmatprep.subr.mxu0 0.0
    %253 = vmatpush1.msra.mxu0 0.0
    %254 = vmatprep.subr.mxu0 0.0
    %255 = vmatpush1.msra.mxu0 0.0
    %256 = vmatprep.subr.mxu0 0.0
    %257 = vmatpush1.msra.mxu0 0.0
    %258 = vmatprep.subr.mxu0 0.0
    %259 = vmatpush1.msra.mxu0 0.0
    %260 = vmatprep.subr.mxu0 0.0
    %261 = vmatpush1.msra.mxu0 0.0
    %262 = vmatprep.subr.mxu0 %v219
    %263 = vmatpush1.msra.mxu0 %v218
    %264 = vmatprep.subr.mxu0 0.0
    %265 = vmatpush2.msra.mxu0 0.0
    %266 = vmatprep.subr.mxu0 0.0
    %267 = vmatpush2.msra.mxu0 0.0
    %268 = vmatprep.subr.mxu0 0.0
    %269 = vmatpush2.msra.mxu0 0.0
    %270 = vmatprep.subr.mxu0 0.0
    %271 = vmatpush2.msra.mxu0 0.0
    %272 = vmatprep.subr.mxu0 0.0
    %273 = vmatpush2.msra.mxu0 0.0
    %274 = vmatprep.subr.mxu0 0.0
    %275 = vmatpush2.msra.mxu0 0.0
    %276 = vmatprep.subr.mxu0 0.0
    %277 = vmatpush2.msra.mxu0 0.0
    %278 = vmatprep.subr.mxu0 0.0
    %279 = vmatpush2.msra.mxu0 0.0
    %280 = vmatprep.subr.mxu0 0.0
    %281 = vmatpush2.msra.mxu0 0.0
    %282 = vmatprep.subr.mxu0 0.0
    %283 = vmatpush2.msra.mxu0 0.0
    %284 = vmatprep.subr.mxu0 0.0
    %285 = vmatpush2.msra.mxu0 0.0
    %286 = vmatprep.subr.mxu0 0.0
    %287 = vmatpush2.msra.mxu0 0.0
    %288 = vmatprep.subr.mxu0 0.0
    %289 = vmatpush2.msra.mxu0 0.0
    %290 = vmatprep.subr.mxu0 0.0
    %291 = vmatpush2.msra.mxu0 0.0
    %292 = vmatprep.subr.mxu0 0.0
    %293 = vmatpush2.msra.mxu0 0.0
    %294 = vmatprep.subr.mxu0 0.0
    %295 = vmatpush2.msra.mxu0 0.0
    %296 = vmatprep.mubr.f32.mxu0 0.0
    %297 = vmatmul.mubr.f32.gmra.mxu0 %v65
    %v298 = vpop.f32.mrf.mxu0
    %v299 = vadd.f32 %v225, %v298
    %v300 = vpop.f32.mrf.mxu0
    %v301 = vadd.f32 %v229, %v300
    %302 = vmatprep.mubr.f32.mxu0 0.0
    %303 = vmatmul.mubr.f32.gmra.mxu0 %v68
    %v304 = vpop.f32.mrf.mxu0
    %v305 = vadd.f32 %v225, %v304
    %v306 = vpop.f32.mrf.mxu0
    %v307 = vadd.f32 %v229, %v306
    %308 = vmatprep.mubr.f32.mxu0 0.0
    %309 = vmatmul.mubr.f32.gmra.mxu0 %v71
    %v310 = vpop.f32.mrf.mxu0
    %v311 = vadd.f32 %v225, %v310
    %v312 = vpop.f32.mrf.mxu0
    %v313 = vadd.f32 %v229, %v312
    %314 = vmatprep.mubr.f32.mxu0 0.0
    %315 = vmatmul.mubr.f32.gmra.mxu0 %v74
    %v316 = vpop.f32.mrf.mxu0
    %v317 = vadd.f32 %v225, %v316
    %v318 = vpop.f32.mrf.mxu0
    %v319 = vadd.f32 %v229, %v318
    %320 = vmatprep.mubr.f32.mxu0 0.0
    %321 = vmatmul.mubr.f32.gmra.mxu0 %v77
    %v322 = vpop.f32.mrf.mxu0
    %v323 = vadd.f32 %v225, %v322
    %v324 = vpop.f32.mrf.mxu0
    %v325 = vadd.f32 %v229, %v324
    %326 = vmatprep.mubr.f32.mxu0 0.0
    %327 = vmatmul.mubr.f32.gmra.mxu0 %v80
    %v328 = vpop.f32.mrf.mxu0
    %v329 = vadd.f32 %v225, %v328
    %v330 = vpop.f32.mrf.mxu0
    %v331 = vadd.f32 %v229, %v330
    %332 = vmatprep.mubr.f32.mxu0 0.0
    %333 = vmatmul.mubr.f32.gmra.mxu0 %v83
    %v334 = vpop.f32.mrf.mxu0
    %v335 = vadd.f32 %v225, %v334
    %v336 = vpop.f32.mrf.mxu0
    %v337 = vadd.f32 %v229, %v336
    %338 = vmatprep.mubr.f32.mxu0 0.0
    %339 = vmatmul.mubr.f32.gmra.mxu0 %v86
    %v340 = vpop.f32.mrf.mxu0
    %v341 = vadd.f32 %v225, %v340
    %v342 = vpop.f32.mrf.mxu0
    %v343 = vadd.f32 %v229, %v342
    %344 = vdwg.mxu0
    %345 = vst [vmem:[#allocation3] sm:$0xff] %v299
    %346 = vst.msk [vmem:[#allocation3 + $0x8] sm:$0xff] %vm202, %v301
    %347 = vst [vmem:[#allocation3 + $0x10] sm:$0xff] %v305
    %348 = vst.msk [vmem:[#allocation3 + $0x18] sm:$0xff] %vm202, %v307
    %349 = vst [vmem:[#allocation3 + $0x20] sm:$0xff] %v311
    %350 = vst.msk [vmem:[#allocation3 + $0x28] sm:$0xff] %vm202, %v313
    %351 = vst [vmem:[#allocation3 + $0x30] sm:$0xff] %v317
    %352 = vst.msk [vmem:[#allocation3 + $0x38] sm:$0xff] %vm202, %v319
    %353 = vst [vmem:[#allocation3 + $0x40] sm:$0xff] %v323
    %354 = vst.msk [vmem:[#allocation3 + $0x48] sm:$0xff] %vm202, %v325
    %355 = vst [vmem:[#allocation3 + $0x50] sm:$0xff] %v329
    %356 = vst.msk [vmem:[#allocation3 + $0x58] sm:$0xff] %vm202, %v331
    %357 = vst [vmem:[#allocation3 + $0x60] sm:$0xff] %v335
    %358 = vst.msk [vmem:[#allocation3 + $0x68] sm:$0xff] %vm202, %v337
    %359 = vst [vmem:[#allocation3 + $0x70] sm:$0xff] %v341
    %360 = vst.msk [vmem:[#allocation3 + $0x78] sm:$0xff] %vm202, %v343
    %s361 = smul.u32 0, 2
    %s362 = smul.addr %s361, 8
    %s363 = scalar_lea.vmem [#allocation2], %s362
    %v364 = vld [vmem:[%s363] sm:$0xff]
    %v365 = vld [vmem:[%s363 + $0x8] sm:$0xff]
    %s366 = smul.u32 7, 2
    %s367 = smul.addr %s366, 8
    %s368 = scalar_lea.vmem [#allocation3], %s367
    %v369 = vld [vmem:[%s368] sm:$0xff]
    %v370 = vld [vmem:[%s368 + $0x8] sm:$0xff]
    %v371 = vadd.f32 %v364, %v369
    %v372 = vadd.f32 %v365, %v370
    %v373 = vld [vmem:[#allocation4] sm:$0xff]
    %v374 = vld [vmem:[#allocation4 + $0x8] sm:$0xff]
    %v375 = vld [vmem:[#allocation4 + $0x10] sm:$0xff]
    %v376 = vld [vmem:[#allocation4 + $0x18] sm:$0xff]
    %v377 = vld [vmem:[#allocation4 + $0x20] sm:$0xff]
    %v378 = vld [vmem:[#allocation4 + $0x28] sm:$0xff]
    %v379 = vld [vmem:[#allocation4 + $0x30] sm:$0xff]
    %v380 = vld [vmem:[#allocation4 + $0x38] sm:$0xff]
    %v381 = vld [vmem:[#allocation4 + $0x40] sm:$0xff]
    %v382 = vld [vmem:[#allocation4 + $0x48] sm:$0xff]
    %v383 = vld [vmem:[#allocation4 + $0x50] sm:$0xff]
    %v384 = vld [vmem:[#allocation4 + $0x58] sm:$0xff]
    %v385 = vld [vmem:[#allocation4 + $0x60] sm:$0xff]
    %v386 = vld [vmem:[#allocation4 + $0x68] sm:$0xff]
    %v387 = vld [vmem:[#allocation4 + $0x70] sm:$0xff]
    %v388 = vld [vmem:[#allocation4 + $0x78] sm:$0xff]
    %v389 = vld [vmem:[%s6] sm:$0x3]
    %v391 = vlaneseq
    %v392 = vshrl.u32 %v391, 7
    %v393 = vsub.s32 0, %v392
    %v394 = vrot.slane %v389, %v393
    %v395 = vlaneseq
    %v396 = vshrl.u32 %v395, 7
    %v397 = vsub.s32 1, %v396
    %v398 = vrot.slane %v389, %v397
    %v402 = vsel %vm202, 0.0, 0
    %404 = vmatprep.subr.mxu0 0.0
    %405 = vmatpush1.msra.mxu0 0.0
    %406 = vmatprep.subr.mxu0 0.0
    %407 = vmatpush1.msra.mxu0 0.0
    %408 = vmatprep.subr.mxu0 0.0
    %409 = vmatpush1.msra.mxu0 0.0
    %410 = vmatprep.subr.mxu0 0.0
    %411 = vmatpush1.msra.mxu0 0.0
    %412 = vmatprep.subr.mxu0 0.0
    %413 = vmatpush1.msra.mxu0 0.0
    %414 = vmatprep.subr.mxu0 0.0
    %415 = vmatpush1.msra.mxu0 0.0
    %416 = vmatprep.subr.mxu0 0.0
    %417 = vmatpush1.msra.mxu0 0.0
    %418 = vmatprep.subr.mxu0 0.0
    %419 = vmatpush1.msra.mxu0 0.0
    %420 = vmatprep.subr.mxu0 %v388
    %421 = vmatpush1.msra.mxu0 %v387
    %422 = vmatprep.subr.mxu0 %v386
    %423 = vmatpush1.msra.mxu0 %v385
    %424 = vmatprep.subr.mxu0 %v384
    %425 = vmatpush1.msra.mxu0 %v383
    %426 = vmatprep.subr.mxu0 %v382
    %427 = vmatpush1.msra.mxu0 %v381
    %428 = vmatprep.subr.mxu0 %v380
    %429 = vmatpush1.msra.mxu0 %v379
    %430 = vmatprep.subr.mxu0 %v378
    %431 = vmatpush1.msra.mxu0 %v377
    %432 = vmatprep.subr.mxu0 %v376
    %433 = vmatpush1.msra.mxu0 %v375
    %434 = vmatprep.subr.mxu0 %v374
    %435 = vmatpush1.msra.mxu0 %v373
    %436 = vmatprep.subr.mxu0 0.0
    %437 = vmatpush2.msra.mxu0 0.0
    %438 = vmatprep.subr.mxu0 0.0
    %439 = vmatpush2.msra.mxu0 0.0
    %440 = vmatprep.subr.mxu0 0.0
    %441 = vmatpush2.msra.mxu0 0.0
    %442 = vmatprep.subr.mxu0 0.0
    %443 = vmatpush2.msra.mxu0 0.0
    %444 = vmatprep.subr.mxu0 0.0
    %445 = vmatpush2.msra.mxu0 0.0
    %446 = vmatprep.subr.mxu0 0.0
    %447 = vmatpush2.msra.mxu0 0.0
    %448 = vmatprep.subr.mxu0 0.0
    %449 = vmatpush2.msra.mxu0 0.0
    %450 = vmatprep.subr.mxu0 0.0
    %451 = vmatpush2.msra.mxu0 0.0
    %452 = vmatprep.subr.mxu0 0.0
    %453 = vmatpush2.msra.mxu0 0.0
    %454 = vmatprep.subr.mxu0 0.0
    %455 = vmatpush2.msra.mxu0 0.0
    %456 = vmatprep.subr.mxu0 0.0
    %457 = vmatpush2.msra.mxu0 0.0
    %458 = vmatprep.subr.mxu0 0.0
    %459 = vmatpush2.msra.mxu0 0.0
    %460 = vmatprep.subr.mxu0 0.0
    %461 = vmatpush2.msra.mxu0 0.0
    %462 = vmatprep.subr.mxu0 0.0
    %463 = vmatpush2.msra.mxu0 0.0
    %464 = vmatprep.subr.mxu0 0.0
    %465 = vmatpush2.msra.mxu0 0.0
    %466 = vmatprep.subr.mxu0 0.0
    %467 = vmatpush2.msra.mxu0 0.0
    %468 = vmatprep.mubr.f32.mxu0 0.0
    %469 = vmatmul.mubr.f32.gmra.mxu0 %v402
    %v470 = vpop.f32.mrf.mxu0
    %v471 = vadd.f32 %v394, %v470
    %v472 = vpop.f32.mrf.mxu0
    %v473 = vadd.f32 %v398, %v472
    %474 = vdwg.mxu0
    %v475 = vadd.f32 %v371, %v471
    %v476 = vxor.u32 %v475, 2147483648
    %v477 = vmul.f32 %v476, 1.442695
    %v478 = vpow.pop %v477
    %v479 = vadd.f32 %v478, 1.0
    %v480 = vrcp.pop %v479
    %v481 = vmul.f32 1.0, %v480
    %v482 = vmul.f32 %v481, %v473
    %v483 = vadd.f32 %v372, %v482
    %v484 = vtanh.pop %v483
    %v485 = vsub.f32 1.0, %v481
    %487 = vrot.lane.b32.xlu0 %v484, 64
    %v488 = vpop.permute.xlu0 %487
    %v490 = vmul.f32 %v485, %v488
    %v491 = vmul.f32 %v481, 0.0
    %v492 = vadd.f32 %v490, %v491
    %494 = vrot.lane.b32.xlu0 %v492, 64
    %v495 = vpop.permute.xlu0 %494
    %vm497 = vcmask 261120
    %498 = vst.msk [vmem:[#allocation7] sm:$0xff] %vm497, %v495
    %s499 = scalar_lea.vmem [#allocation7], 56
    %vm500 = vcmask 523520
    %501 = vst.msk [vmem:[%s499] sm:$0xff] %vm500, %v495
    %s502 = smul.u32 1, 2
    %s503 = smul.addr %s502, 8
    %s504 = scalar_lea.vmem [#allocation2], %s503
    %v505 = vld [vmem:[%s504] sm:$0xff]
    %v506 = vld [vmem:[%s504 + $0x8] sm:$0xff]
    %s507 = smul.u32 6, 2
    %s508 = smul.addr %s507, 8
    %s509 = scalar_lea.vmem [#allocation3], %s508
    %v510 = vld [vmem:[%s509] sm:$0xff]
    %v511 = vld [vmem:[%s509 + $0x8] sm:$0xff]
    %v512 = vadd.f32 %v505, %v510
    %v513 = vadd.f32 %v506, %v511
    %v514 = vld [vmem:[#allocation4] sm:$0xff]
    %v515 = vld [vmem:[#allocation4 + $0x8] sm:$0xff]
    %v516 = vld [vmem:[#allocation4 + $0x10] sm:$0xff]
    %v517 = vld [vmem:[#allocation4 + $0x18] sm:$0xff]
    %v518 = vld [vmem:[#allocation4 + $0x20] sm:$0xff]
    %v519 = vld [vmem:[#allocation4 + $0x28] sm:$0xff]
    %v520 = vld [vmem:[#allocation4 + $0x30] sm:$0xff]
    %v521 = vld [vmem:[#allocation4 + $0x38] sm:$0xff]
    %v522 = vld [vmem:[#allocation4 + $0x40] sm:$0xff]
    %v523 = vld [vmem:[#allocation4 + $0x48] sm:$0xff]
    %v524 = vld [vmem:[#allocation4 + $0x50] sm:$0xff]
    %v525 = vld [vmem:[#allocation4 + $0x58] sm:$0xff]
    %v526 = vld [vmem:[#allocation4 + $0x60] sm:$0xff]
    %v527 = vld [vmem:[#allocation4 + $0x68] sm:$0xff]
    %v528 = vld [vmem:[#allocation4 + $0x70] sm:$0xff]
    %v529 = vld [vmem:[#allocation4 + $0x78] sm:$0xff]
    %v530 = vld [vmem:[%s6] sm:$0x3]
    %v532 = vlaneseq
    %v533 = vshrl.u32 %v532, 7
    %v534 = vsub.s32 0, %v533
    %v535 = vrot.slane %v530, %v534
    %v536 = vlaneseq
    %v537 = vshrl.u32 %v536, 7
    %v538 = vsub.s32 1, %v537
    %v539 = vrot.slane %v530, %v538
    %v542 = vsel %vm202, %v495, 0
    %544 = vmatprep.subr.mxu0 0.0
    %545 = vmatpush1.msra.mxu0 0.0
    %546 = vmatprep.subr.mxu0 0.0
    %547 = vmatpush1.msra.mxu0 0.0
    %548 = vmatprep.subr.mxu0 0.0
    %549 = vmatpush1.msra.mxu0 0.0
    %550 = vmatprep.subr.mxu0 0.0
    %551 = vmatpush1.msra.mxu0 0.0
    %552 = vmatprep.subr.mxu0 0.0
    %553 = vmatpush1.msra.mxu0 0.0
    %554 = vmatprep.subr.mxu0 0.0
    %555 = vmatpush1.msra.mxu0 0.0
    %556 = vmatprep.subr.mxu0 0.0
    %557 = vmatpush1.msra.mxu0 0.0
    %558 = vmatprep.subr.mxu0 0.0
    %559 = vmatpush1.msra.mxu0 0.0
    %560 = vmatprep.subr.mxu0 %v529
    %561 = vmatpush1.msra.mxu0 %v528
    %562 = vmatprep.subr.mxu0 %v527
    %563 = vmatpush1.msra.mxu0 %v526
    %564 = vmatprep.subr.mxu0 %v525
    %565 = vmatpush1.msra.mxu0 %v524
    %566 = vmatprep.subr.mxu0 %v523
    %567 = vmatpush1.msra.mxu0 %v522
    %568 = vmatprep.subr.mxu0 %v521
    %569 = vmatpush1.msra.mxu0 %v520
    %570 = vmatprep.subr.mxu0 %v519
    %571 = vmatpush1.msra.mxu0 %v518
    %572 = vmatprep.subr.mxu0 %v517
    %573 = vmatpush1.msra.mxu0 %v516
    %574 = vmatprep.subr.mxu0 %v515
    %575 = vmatpush1.msra.mxu0 %v514
    %576 = vmatprep.subr.mxu0 0.0
    %577 = vmatpush2.msra.mxu0 0.0
    %578 = vmatprep.subr.mxu0 0.0
    %579 = vmatpush2.msra.mxu0 0.0
    %580 = vmatprep.subr.mxu0 0.0
    %581 = vmatpush2.msra.mxu0 0.0
    %582 = vmatprep.subr.mxu0 0.0
    %583 = vmatpush2.msra.mxu0 0.0
    %584 = vmatprep.subr.mxu0 0.0
    %585 = vmatpush2.msra.mxu0 0.0
    %586 = vmatprep.subr.mxu0 0.0
    %587 = vmatpush2.msra.mxu0 0.0
    %588 = vmatprep.subr.mxu0 0.0
    %589 = vmatpush2.msra.mxu0 0.0
    %590 = vmatprep.subr.mxu0 0.0
    %591 = vmatpush2.msra.mxu0 0.0
    %592 = vmatprep.subr.mxu0 0.0
    %593 = vmatpush2.msra.mxu0 0.0
    %594 = vmatprep.subr.mxu0 0.0
    %595 = vmatpush2.msra.mxu0 0.0
    %596 = vmatprep.subr.mxu0 0.0
    %597 = vmatpush2.msra.mxu0 0.0
    %598 = vmatprep.subr.mxu0 0.0
    %599 = vmatpush2.msra.mxu0 0.0
    %600 = vmatprep.subr.mxu0 0.0
    %601 = vmatpush2.msra.mxu0 0.0
    %602 = vmatprep.subr.mxu0 0.0
    %603 = vmatpush2.msra.mxu0 0.0
    %604 = vmatprep.subr.mxu0 0.0
    %605 = vmatpush2.msra.mxu0 0.0
    %606 = vmatprep.subr.mxu0 0.0
    %607 = vmatpush2.msra.mxu0 0.0
    %608 = vmatprep.mubr.f32.mxu0 0.0
    %609 = vmatmul.mubr.f32.gmra.mxu0 %v542
    %v610 = vpop.f32.mrf.mxu0
    %v611 = vadd.f32 %v535, %v610
    %v612 = vpop.f32.mrf.mxu0
    %v613 = vadd.f32 %v539, %v612
    %614 = vdwg.mxu0
    %v615 = vadd.f32 %v512, %v611
    %v616 = vxor.u32 %v615, 2147483648
    %v617 = vmul.f32 %v616, 1.442695
    %v618 = vpow.pop %v617
    %v619 = vadd.f32 %v618, 1.0
    %v620 = vrcp.pop %v619
    %v621 = vmul.f32 1.0, %v620
    %v622 = vmul.f32 %v621, %v613
    %v623 = vadd.f32 %v513, %v622
    %v624 = vtanh.pop %v623
    %v625 = vsub.f32 1.0, %v621
    %627 = vrot.lane.b32.xlu0 %v624, 64
    %v628 = vpop.permute.xlu0 %627
    %v630 = vmul.f32 %v625, %v628
    %v631 = vmul.f32 %v621, %v492
    %v632 = vadd.f32 %v630, %v631
    %634 = vrot.lane.b32.xlu0 %v632, 64
    %v635 = vpop.permute.xlu0 %634
    %s637 = scalar_lea.vmem [#allocation7], 8
    %638 = vst.msk [vmem:[%s637] sm:$0xff] %vm497, %v635
    %s639 = scalar_lea.vmem [#allocation7], 48
    %640 = vst.msk [vmem:[%s639] sm:$0xff] %vm500, %v635
    %s641 = smul.u32 2, 2
    %s642 = smul.addr %s641, 8
    %s643 = scalar_lea.vmem [#allocation2], %s642
    %v644 = vld [vmem:[%s643] sm:$0xff]
    %v645 = vld [vmem:[%s643 + $0x8] sm:$0xff]
    %s646 = smul.u32 5, 2
    %s647 = smul.addr %s646, 8
    %s648 = scalar_lea.vmem [#allocation3], %s647
    %v649 = vld [vmem:[%s648] sm:$0xff]
    %v650 = vld [vmem:[%s648 + $0x8] sm:$0xff]
    %v651 = vadd.f32 %v644, %v649
    %v652 = vadd.f32 %v645, %v650
    %v653 = vld [vmem:[#allocation4] sm:$0xff]
    %v654 = vld [vmem:[#allocation4 + $0x8] sm:$0xff]
    %v655 = vld [vmem:[#allocation4 + $0x10] sm:$0xff]
    %v656 = vld [vmem:[#allocation4 + $0x18] sm:$0xff]
    %v657 = vld [vmem:[#allocation4 + $0x20] sm:$0xff]
    %v658 = vld [vmem:[#allocation4 + $0x28] sm:$0xff]
    %v659 = vld [vmem:[#allocation4 + $0x30] sm:$0xff]
    %v660 = vld [vmem:[#allocation4 + $0x38] sm:$0xff]
    %v661 = vld [vmem:[#allocation4 + $0x40] sm:$0xff]
    %v662 = vld [vmem:[#allocation4 + $0x48] sm:$0xff]
    %v663 = vld [vmem:[#allocation4 + $0x50] sm:$0xff]
    %v664 = vld [vmem:[#allocation4 + $0x58] sm:$0xff]
    %v665 = vld [vmem:[#allocation4 + $0x60] sm:$0xff]
    %v666 = vld [vmem:[#allocation4 + $0x68] sm:$0xff]
    %v667 = vld [vmem:[#allocation4 + $0x70] sm:$0xff]
    %v668 = vld [vmem:[#allocation4 + $0x78] sm:$0xff]
    %v669 = vld [vmem:[%s6] sm:$0x3]
    %v671 = vlaneseq
    %v672 = vshrl.u32 %v671, 7
    %v673 = vsub.s32 0, %v672
    %v674 = vrot.slane %v669, %v673
    %v675 = vlaneseq
    %v676 = vshrl.u32 %v675, 7
    %v677 = vsub.s32 1, %v676
    %v678 = vrot.slane %v669, %v677
    %v681 = vsel %vm202, %v635, 0
    %683 = vmatprep.subr.mxu0 0.0
    %684 = vmatpush1.msra.mxu0 0.0
    %685 = vmatprep.subr.mxu0 0.0
    %686 = vmatpush1.msra.mxu0 0.0
    %687 = vmatprep.subr.mxu0 0.0
    %688 = vmatpush1.msra.mxu0 0.0
    %689 = vmatprep.subr.mxu0 0.0
    %690 = vmatpush1.msra.mxu0 0.0
    %691 = vmatprep.subr.mxu0 0.0
    %692 = vmatpush1.msra.mxu0 0.0
    %693 = vmatprep.subr.mxu0 0.0
    %694 = vmatpush1.msra.mxu0 0.0
    %695 = vmatprep.subr.mxu0 0.0
    %696 = vmatpush1.msra.mxu0 0.0
    %697 = vmatprep.subr.mxu0 0.0
    %698 = vmatpush1.msra.mxu0 0.0
    %699 = vmatprep.subr.mxu0 %v668
    %700 = vmatpush1.msra.mxu0 %v667
    %701 = vmatprep.subr.mxu0 %v666
    %702 = vmatpush1.msra.mxu0 %v665
    %703 = vmatprep.subr.mxu0 %v664
    %704 = vmatpush1.msra.mxu0 %v663
    %705 = vmatprep.subr.mxu0 %v662
    %706 = vmatpush1.msra.mxu0 %v661
    %707 = vmatprep.subr.mxu0 %v660
    %708 = vmatpush1.msra.mxu0 %v659
    %709 = vmatprep.subr.mxu0 %v658
    %710 = vmatpush1.msra.mxu0 %v657
    %711 = vmatprep.subr.mxu0 %v656
    %712 = vmatpush1.msra.mxu0 %v655
    %713 = vmatprep.subr.mxu0 %v654
    %714 = vmatpush1.msra.mxu0 %v653
    %715 = vmatprep.subr.mxu0 0.0
    %716 = vmatpush2.msra.mxu0 0.0
    %717 = vmatprep.subr.mxu0 0.0
    %718 = vmatpush2.msra.mxu0 0.0
    %719 = vmatprep.subr.mxu0 0.0
    %720 = vmatpush2.msra.mxu0 0.0
    %721 = vmatprep.subr.mxu0 0.0
    %722 = vmatpush2.msra.mxu0 0.0
    %723 = vmatprep.subr.mxu0 0.0
    %724 = vmatpush2.msra.mxu0 0.0
    %725 = vmatprep.subr.mxu0 0.0
    %726 = vmatpush2.msra.mxu0 0.0
    %727 = vmatprep.subr.mxu0 0.0
    %728 = vmatpush2.msra.mxu0 0.0
    %729 = vmatprep.subr.mxu0 0.0
    %730 = vmatpush2.msra.mxu0 0.0
    %731 = vmatprep.subr.mxu0 0.0
    %732 = vmatpush2.msra.mxu0 0.0
    %733 = vmatprep.subr.mxu0 0.0
    %734 = vmatpush2.msra.mxu0 0.0
    %735 = vmatprep.subr.mxu0 0.0
    %736 = vmatpush2.msra.mxu0 0.0
    %737 = vmatprep.subr.mxu0 0.0
    %738 = vmatpush2.msra.mxu0 0.0
    %739 = vmatprep.subr.mxu0 0.0
    %740 = vmatpush2.msra.mxu0 0.0
    %741 = vmatprep.subr.mxu0 0.0
    %742 = vmatpush2.msra.mxu0 0.0
    %743 = vmatprep.subr.mxu0 0.0
    %744 = vmatpush2.msra.mxu0 0.0
    %745 = vmatprep.subr.mxu0 0.0
    %746 = vmatpush2.msra.mxu0 0.0
    %747 = vmatprep.mubr.f32.mxu0 0.0
    %748 = vmatmul.mubr.f32.gmra.mxu0 %v681
    %v749 = vpop.f32.mrf.mxu0
    %v750 = vadd.f32 %v674, %v749
    %v751 = vpop.f32.mrf.mxu0
    %v752 = vadd.f32 %v678, %v751
    %753 = vdwg.mxu0
    %v754 = vadd.f32 %v651, %v750
    %v755 = vxor.u32 %v754, 2147483648
    %v756 = vmul.f32 %v755, 1.442695
    %v757 = vpow.pop %v756
    %v758 = vadd.f32 %v757, 1.0
    %v759 = vrcp.pop %v758
    %v760 = vmul.f32 1.0, %v759
    %v761 = vmul.f32 %v760, %v752
    %v762 = vadd.f32 %v652, %v761
    %v763 = vtanh.pop %v762
    %v764 = vsub.f32 1.0, %v760
    %766 = vrot.lane.b32.xlu0 %v763, 64
    %v767 = vpop.permute.xlu0 %766
    %v769 = vmul.f32 %v764, %v767
    %v770 = vmul.f32 %v760, %v632
    %v771 = vadd.f32 %v769, %v770
    %773 = vrot.lane.b32.xlu0 %v771, 64
    %v774 = vpop.permute.xlu0 %773
    %s776 = scalar_lea.vmem [#allocation7], 16
    %777 = vst.msk [vmem:[%s776] sm:$0xff] %vm497, %v774
    %s778 = scalar_lea.vmem [#allocation7], 40
    %779 = vst.msk [vmem:[%s778] sm:$0xff] %vm500, %v774
    %s780 = smul.u32 3, 2
    %s781 = smul.addr %s780, 8
    %s782 = scalar_lea.vmem [#allocation2], %s781
    %v783 = vld [vmem:[%s782] sm:$0xff]
    %v784 = vld [vmem:[%s782 + $0x8] sm:$0xff]
    %s785 = smul.u32 4, 2
    %s786 = smul.addr %s785, 8
    %s787 = scalar_lea.vmem [#allocation3], %s786
    %v788 = vld [vmem:[%s787] sm:$0xff]
    %v789 = vld [vmem:[%s787 + $0x8] sm:$0xff]
    %v790 = vadd.f32 %v783, %v788
    %v791 = vadd.f32 %v784, %v789
    %v792 = vld [vmem:[#allocation4] sm:$0xff]
    %v793 = vld [vmem:[#allocation4 + $0x8] sm:$0xff]
    %v794 = vld [vmem:[#allocation4 + $0x10] sm:$0xff]
    %v795 = vld [vmem:[#allocation4 + $0x18] sm:$0xff]
    %v796 = vld [vmem:[#allocation4 + $0x20] sm:$0xff]
    %v797 = vld [vmem:[#allocation4 + $0x28] sm:$0xff]
    %v798 = vld [vmem:[#allocation4 + $0x30] sm:$0xff]
    %v799 = vld [vmem:[#allocation4 + $0x38] sm:$0xff]
    %v800 = vld [vmem:[#allocation4 + $0x40] sm:$0xff]
    %v801 = vld [vmem:[#allocation4 + $0x48] sm:$0xff]
    %v802 = vld [vmem:[#allocation4 + $0x50] sm:$0xff]
    %v803 = vld [vmem:[#allocation4 + $0x58] sm:$0xff]
    %v804 = vld [vmem:[#allocation4 + $0x60] sm:$0xff]
    %v805 = vld [vmem:[#allocation4 + $0x68] sm:$0xff]
    %v806 = vld [vmem:[#allocation4 + $0x70] sm:$0xff]
    %v807 = vld [vmem:[#allocation4 + $0x78] sm:$0xff]
    %v808 = vld [vmem:[%s6] sm:$0x3]
    %v810 = vlaneseq
    %v811 = vshrl.u32 %v810, 7
    %v812 = vsub.s32 0, %v811
    %v813 = vrot.slane %v808, %v812
    %v814 = vlaneseq
    %v815 = vshrl.u32 %v814, 7
    %v816 = vsub.s32 1, %v815
    %v817 = vrot.slane %v808, %v816
    %v820 = vsel %vm202, %v774, 0
    %822 = vmatprep.subr.mxu0 0.0
    %823 = vmatpush1.msra.mxu0 0.0
    %824 = vmatprep.subr.mxu0 0.0
    %825 = vmatpush1.msra.mxu0 0.0
    %826 = vmatprep.subr.mxu0 0.0
    %827 = vmatpush1.msra.mxu0 0.0
    %828 = vmatprep.subr.mxu0 0.0
    %829 = vmatpush1.msra.mxu0 0.0
    %830 = vmatprep.subr.mxu0 0.0
    %831 = vmatpush1.msra.mxu0 0.0
    %832 = vmatprep.subr.mxu0 0.0
    %833 = vmatpush1.msra.mxu0 0.0
    %834 = vmatprep.subr.mxu0 0.0
    %835 = vmatpush1.msra.mxu0 0.0
    %836 = vmatprep.subr.mxu0 0.0
    %837 = vmatpush1.msra.mxu0 0.0
    %838 = vmatprep.subr.mxu0 %v807
    %839 = vmatpush1.msra.mxu0 %v806
    %840 = vmatprep.subr.mxu0 %v805
    %841 = vmatpush1.msra.mxu0 %v804
    %842 = vmatprep.subr.mxu0 %v803
    %843 = vmatpush1.msra.mxu0 %v802
    %844 = vmatprep.subr.mxu0 %v801
    %845 = vmatpush1.msra.mxu0 %v800
    %846 = vmatprep.subr.mxu0 %v799
    %847 = vmatpush1.msra.mxu0 %v798
    %848 = vmatprep.subr.mxu0 %v797
    %849 = vmatpush1.msra.mxu0 %v796
    %850 = vmatprep.subr.mxu0 %v795
    %851 = vmatpush1.msra.mxu0 %v794
    %852 = vmatprep.subr.mxu0 %v793
    %853 = vmatpush1.msra.mxu0 %v792
    %854 = vmatprep.subr.mxu0 0.0
    %855 = vmatpush2.msra.mxu0 0.0
    %856 = vmatprep.subr.mxu0 0.0
    %857 = vmatpush2.msra.mxu0 0.0
    %858 = vmatprep.subr.mxu0 0.0
    %859 = vmatpush2.msra.mxu0 0.0
    %860 = vmatprep.subr.mxu0 0.0
    %861 = vmatpush2.msra.mxu0 0.0
    %862 = vmatprep.subr.mxu0 0.0
    %863 = vmatpush2.msra.mxu0 0.0
    %864 = vmatprep.subr.mxu0 0.0
    %865 = vmatpush2.msra.mxu0 0.0
    %866 = vmatprep.subr.mxu0 0.0
    %867 = vmatpush2.msra.mxu0 0.0
    %868 = vmatprep.subr.mxu0 0.0
    %869 = vmatpush2.msra.mxu0 0.0
    %870 = vmatprep.subr.mxu0 0.0
    %871 = vmatpush2.msra.mxu0 0.0
    %872 = vmatprep.subr.mxu0 0.0
    %873 = vmatpush2.msra.mxu0 0.0
    %874 = vmatprep.subr.mxu0 0.0
    %875 = vmatpush2.msra.mxu0 0.0
    %876 = vmatprep.subr.mxu0 0.0
    %877 = vmatpush2.msra.mxu0 0.0
    %878 = vmatprep.subr.mxu0 0.0
    %879 = vmatpush2.msra.mxu0 0.0
    %880 = vmatprep.subr.mxu0 0.0
    %881 = vmatpush2.msra.mxu0 0.0
    %882 = vmatprep.subr.mxu0 0.0
    %883 = vmatpush2.msra.mxu0 0.0
    %884 = vmatprep.subr.mxu0 0.0
    %885 = vmatpush2.msra.mxu0 0.0
    %886 = vmatprep.mubr.f32.mxu0 0.0
    %887 = vmatmul.mubr.f32.gmra.mxu0 %v820
    %v888 = vpop.f32.mrf.mxu0
    %v889 = vadd.f32 %v813, %v888
    %v890 = vpop.f32.mrf.mxu0
    %v891 = vadd.f32 %v817, %v890
    %892 = vdwg.mxu0
    %v893 = vadd.f32 %v790, %v889
    %v894 = vxor.u32 %v893, 2147483648
    %v895 = vmul.f32 %v894, 1.442695
    %v896 = vpow.pop %v895
    %v897 = vadd.f32 %v896, 1.0
    %v898 = vrcp.pop %v897
    %v899 = vmul.f32 1.0, %v898
    %v900 = vmul.f32 %v899, %v891
    %v901 = vadd.f32 %v791, %v900
    %v902 = vtanh.pop %v901
    %v903 = vsub.f32 1.0, %v899
    %905 = vrot.lane.b32.xlu0 %v902, 64
    %v906 = vpop.permute.xlu0 %905
    %v908 = vmul.f32 %v903, %v906
    %v909 = vmul.f32 %v899, %v771
    %v910 = vadd.f32 %v908, %v909
    %912 = vrot.lane.b32.xlu0 %v910, 64
    %v913 = vpop.permute.xlu0 %912
    %s915 = scalar_lea.vmem [#allocation7], 24
    %916 = vst.msk [vmem:[%s915] sm:$0xff] %vm497, %v913
    %s917 = scalar_lea.vmem [#allocation7], 32
    %918 = vst.msk [vmem:[%s917] sm:$0xff] %vm500, %v913
    %s919 = smul.addr %s785, 8
    %s920 = scalar_lea.vmem [#allocation2], %s919
    %v921 = vld [vmem:[%s920] sm:$0xff]
    %v922 = vld [vmem:[%s920 + $0x8] sm:$0xff]
    %s923 = smul.addr %s780, 8
    %s924 = scalar_lea.vmem [#allocation3], %s923
    %v925 = vld [vmem:[%s924] sm:$0xff]
    %v926 = vld [vmem:[%s924 + $0x8] sm:$0xff]
    %v927 = vadd.f32 %v921, %v925
    %v928 = vadd.f32 %v922, %v926
    %v929 = vld [vmem:[#allocation4] sm:$0xff]
    %v930 = vld [vmem:[#allocation4 + $0x8] sm:$0xff]
    %v931 = vld [vmem:[#allocation4 + $0x10] sm:$0xff]
    %v932 = vld [vmem:[#allocation4 + $0x18] sm:$0xff]
    %v933 = vld [vmem:[#allocation4 + $0x20] sm:$0xff]
    %v934 = vld [vmem:[#allocation4 + $0x28] sm:$0xff]
    %v935 = vld [vmem:[#allocation4 + $0x30] sm:$0xff]
    %v936 = vld [vmem:[#allocation4 + $0x38] sm:$0xff]
    %v937 = vld [vmem:[#allocation4 + $0x40] sm:$0xff]
    %v938 = vld [vmem:[#allocation4 + $0x48] sm:$0xff]
    %v939 = vld [vmem:[#allocation4 + $0x50] sm:$0xff]
    %v940 = vld [vmem:[#allocation4 + $0x58] sm:$0xff]
    %v941 = vld [vmem:[#allocation4 + $0x60] sm:$0xff]
    %v942 = vld [vmem:[#allocation4 + $0x68] sm:$0xff]
    %v943 = vld [vmem:[#allocation4 + $0x70] sm:$0xff]
    %v944 = vld [vmem:[#allocation4 + $0x78] sm:$0xff]
    %v945 = vld [vmem:[%s6] sm:$0x3]
    %v947 = vlaneseq
    %v948 = vshrl.u32 %v947, 7
    %v949 = vsub.s32 0, %v948
    %v950 = vrot.slane %v945, %v949
    %v951 = vlaneseq
    %v952 = vshrl.u32 %v951, 7
    %v953 = vsub.s32 1, %v952
    %v954 = vrot.slane %v945, %v953
    %v957 = vsel %vm202, %v913, 0
    %959 = vmatprep.subr.mxu0 0.0
    %960 = vmatpush1.msra.mxu0 0.0
    %961 = vmatprep.subr.mxu0 0.0
    %962 = vmatpush1.msra.mxu0 0.0
    %963 = vmatprep.subr.mxu0 0.0
    %964 = vmatpush1.msra.mxu0 0.0
    %965 = vmatprep.subr.mxu0 0.0
    %966 = vmatpush1.msra.mxu0 0.0
    %967 = vmatprep.subr.mxu0 0.0
    %968 = vmatpush1.msra.mxu0 0.0
    %969 = vmatprep.subr.mxu0 0.0
    %970 = vmatpush1.msra.mxu0 0.0
    %971 = vmatprep.subr.mxu0 0.0
    %972 = vmatpush1.msra.mxu0 0.0
    %973 = vmatprep.subr.mxu0 0.0
    %974 = vmatpush1.msra.mxu0 0.0
    %975 = vmatprep.subr.mxu0 %v944
    %976 = vmatpush1.msra.mxu0 %v943
    %977 = vmatprep.subr.mxu0 %v942
    %978 = vmatpush1.msra.mxu0 %v941
    %979 = vmatprep.subr.mxu0 %v940
    %980 = vmatpush1.msra.mxu0 %v939
    %981 = vmatprep.subr.mxu0 %v938
    %982 = vmatpush1.msra.mxu0 %v937
    %983 = vmatprep.subr.mxu0 %v936
    %984 = vmatpush1.msra.mxu0 %v935
    %985 = vmatprep.subr.mxu0 %v934
    %986 = vmatpush1.msra.mxu0 %v933
    %987 = vmatprep.subr.mxu0 %v932
    %988 = vmatpush1.msra.mxu0 %v931
    %989 = vmatprep.subr.mxu0 %v930
    %990 = vmatpush1.msra.mxu0 %v929
    %991 = vmatprep.subr.mxu0 0.0
    %992 = vmatpush2.msra.mxu0 0.0
    %993 = vmatprep.subr.mxu0 0.0
    %994 = vmatpush2.msra.mxu0 0.0
    %995 = vmatprep.subr.mxu0 0.0
    %996 = vmatpush2.msra.mxu0 0.0
    %997 = vmatprep.subr.mxu0 0.0
    %998 = vmatpush2.msra.mxu0 0.0
    %999 = vmatprep.subr.mxu0 0.0
    %1000 = vmatpush2.msra.mxu0 0.0
    %1001 = vmatprep.subr.mxu0 0.0
    %1002 = vmatpush2.msra.mxu0 0.0
    %1003 = vmatprep.subr.mxu0 0.0
    %1004 = vmatpush2.msra.mxu0 0.0
    %1005 = vmatprep.subr.mxu0 0.0
    %1006 = vmatpush2.msra.mxu0 0.0
    %1007 = vmatprep.subr.mxu0 0.0
    %1008 = vmatpush2.msra.mxu0 0.0
    %1009 = vmatprep.subr.mxu0 0.0
    %1010 = vmatpush2.msra.mxu0 0.0
    %1011 = vmatprep.subr.mxu0 0.0
    %1012 = vmatpush2.msra.mxu0 0.0
    %1013 = vmatprep.subr.mxu0 0.0
    %1014 = vmatpush2.msra.mxu0 0.0
    %1015 = vmatprep.subr.mxu0 0.0
    %1016 = vmatpush2.msra.mxu0 0.0
    %1017 = vmatprep.subr.mxu0 0.0
    %1018 = vmatpush2.msra.mxu0 0.0
    %1019 = vmatprep.subr.mxu0 0.0
    %1020 = vmatpush2.msra.mxu0 0.0
    %1021 = vmatprep.subr.mxu0 0.0
    %1022 = vmatpush2.msra.mxu0 0.0
    %1023 = vmatprep.mubr.f32.mxu0 0.0
    %1024 = vmatmul.mubr.f32.gmra.mxu0 %v957
    %v1025 = vpop.f32.mrf.mxu0
    %v1026 = vadd.f32 %v950, %v1025
    %v1027 = vpop.f32.mrf.mxu0
    %v1028 = vadd.f32 %v954, %v1027
    %1029 = vdwg.mxu0
    %v1030 = vadd.f32 %v927, %v1026
    %v1031 = vxor.u32 %v1030, 2147483648
    %v1032 = vmul.f32 %v1031, 1.442695
    %v1033 = vpow.pop %v1032
    %v1034 = vadd.f32 %v1033, 1.0
    %v1035 = vrcp.pop %v1034
    %v1036 = vmul.f32 1.0, %v1035
    %v1037 = vmul.f32 %v1036, %v1028
    %v1038 = vadd.f32 %v928, %v1037
    %v1039 = vtanh.pop %v1038
    %v1040 = vsub.f32 1.0, %v1036
    %1042 = vrot.lane.b32.xlu0 %v1039, 64
    %v1043 = vpop.permute.xlu0 %1042
    %v1045 = vmul.f32 %v1040, %v1043
    %v1046 = vmul.f32 %v1036, %v910
    %v1047 = vadd.f32 %v1045, %v1046
    %1049 = vrot.lane.b32.xlu0 %v1047, 64
    %v1050 = vpop.permute.xlu0 %1049
    %1052 = vst.msk [vmem:[%s917] sm:$0xff] %vm497, %v1050
    %1053 = vst.msk [vmem:[%s915] sm:$0xff] %vm500, %v1050
    %s1054 = smul.addr %s646, 8
    %s1055 = scalar_lea.vmem [#allocation2], %s1054
    %v1056 = vld [vmem:[%s1055] sm:$0xff]
    %v1057 = vld [vmem:[%s1055 + $0x8] sm:$0xff]
    %s1058 = smul.addr %s641, 8
    %s1059 = scalar_lea.vmem [#allocation3], %s1058
    %v1060 = vld [vmem:[%s1059] sm:$0xff]
    %v1061 = vld [vmem:[%s1059 + $0x8] sm:$0xff]
    %v1062 = vadd.f32 %v1056, %v1060
    %v1063 = vadd.f32 %v1057, %v1061
    %v1064 = vld [vmem:[#allocation4] sm:$0xff]
    %v1065 = vld [vmem:[#allocation4 + $0x8] sm:$0xff]
    %v1066 = vld [vmem:[#allocation4 + $0x10] sm:$0xff]
    %v1067 = vld [vmem:[#allocation4 + $0x18] sm:$0xff]
    %v1068 = vld [vmem:[#allocation4 + $0x20] sm:$0xff]
    %v1069 = vld [vmem:[#allocation4 + $0x28] sm:$0xff]
    %v1070 = vld [vmem:[#allocation4 + $0x30] sm:$0xff]
    %v1071 = vld [vmem:[#allocation4 + $0x38] sm:$0xff]
    %v1072 = vld [vmem:[#allocation4 + $0x40] sm:$0xff]
    %v1073 = vld [vmem:[#allocation4 + $0x48] sm:$0xff]
    %v1074 = vld [vmem:[#allocation4 + $0x50] sm:$0xff]
    %v1075 = vld [vmem:[#allocation4 + $0x58] sm:$0xff]
    %v1076 = vld [vmem:[#allocation4 + $0x60] sm:$0xff]
    %v1077 = vld [vmem:[#allocation4 + $0x68] sm:$0xff]
    %v1078 = vld [vmem:[#allocation4 + $0x70] sm:$0xff]
    %v1079 = vld [vmem:[#allocation4 + $0x78] sm:$0xff]
    %v1080 = vld [vmem:[%s6] sm:$0x3]
    %v1082 = vlaneseq
    %v1083 = vshrl.u32 %v1082, 7
    %v1084 = vsub.s32 0, %v1083
    %v1085 = vrot.slane %v1080, %v1084
    %v1086 = vlaneseq
    %v1087 = vshrl.u32 %v1086, 7
    %v1088 = vsub.s32 1, %v1087
    %v1089 = vrot.slane %v1080, %v1088
    %v1092 = vsel %vm202, %v1050, 0
    %1094 = vmatprep.subr.mxu0 0.0
    %1095 = vmatpush1.msra.mxu0 0.0
    %1096 = vmatprep.subr.mxu0 0.0
    %1097 = vmatpush1.msra.mxu0 0.0
    %1098 = vmatprep.subr.mxu0 0.0
    %1099 = vmatpush1.msra.mxu0 0.0
    %1100 = vmatprep.subr.mxu0 0.0
    %1101 = vmatpush1.msra.mxu0 0.0
    %1102 = vmatprep.subr.mxu0 0.0
    %1103 = vmatpush1.msra.mxu0 0.0
    %1104 = vmatprep.subr.mxu0 0.0
    %1105 = vmatpush1.msra.mxu0 0.0
    %1106 = vmatprep.subr.mxu0 0.0
    %1107 = vmatpush1.msra.mxu0 0.0
    %1108 = vmatprep.subr.mxu0 0.0
    %1109 = vmatpush1.msra.mxu0 0.0
    %1110 = vmatprep.subr.mxu0 %v1079
    %1111 = vmatpush1.msra.mxu0 %v1078
    %1112 = vmatprep.subr.mxu0 %v1077
    %1113 = vmatpush1.msra.mxu0 %v1076
    %1114 = vmatprep.subr.mxu0 %v1075
    %1115 = vmatpush1.msra.mxu0 %v1074
    %1116 = vmatprep.subr.mxu0 %v1073
    %1117 = vmatpush1.msra.mxu0 %v1072
    %1118 = vmatprep.subr.mxu0 %v1071
    %1119 = vmatpush1.msra.mxu0 %v1070
    %1120 = vmatprep.subr.mxu0 %v1069
    %1121 = vmatpush1.msra.mxu0 %v1068
    %1122 = vmatprep.subr.mxu0 %v1067
    %1123 = vmatpush1.msra.mxu0 %v1066
    %1124 = vmatprep.subr.mxu0 %v1065
    %1125 = vmatpush1.msra.mxu0 %v1064
    %1126 = vmatprep.subr.mxu0 0.0
    %1127 = vmatpush2.msra.mxu0 0.0
    %1128 = vmatprep.subr.mxu0 0.0
    %1129 = vmatpush2.msra.mxu0 0.0
    %1130 = vmatprep.subr.mxu0 0.0
    %1131 = vmatpush2.msra.mxu0 0.0
    %1132 = vmatprep.subr.mxu0 0.0
    %1133 = vmatpush2.msra.mxu0 0.0
    %1134 = vmatprep.subr.mxu0 0.0
    %1135 = vmatpush2.msra.mxu0 0.0
    %1136 = vmatprep.subr.mxu0 0.0
    %1137 = vmatpush2.msra.mxu0 0.0
    %1138 = vmatprep.subr.mxu0 0.0
    %1139 = vmatpush2.msra.mxu0 0.0
    %1140 = vmatprep.subr.mxu0 0.0
    %1141 = vmatpush2.msra.mxu0 0.0
    %1142 = vmatprep.subr.mxu0 0.0
    %1143 = vmatpush2.msra.mxu0 0.0
    %1144 = vmatprep.subr.mxu0 0.0
    %1145 = vmatpush2.msra.mxu0 0.0
    %1146 = vmatprep.subr.mxu0 0.0
    %1147 = vmatpush2.msra.mxu0 0.0
    %1148 = vmatprep.subr.mxu0 0.0
    %1149 = vmatpush2.msra.mxu0 0.0
    %1150 = vmatprep.subr.mxu0 0.0
    %1151 = vmatpush2.msra.mxu0 0.0
    %1152 = vmatprep.subr.mxu0 0.0
    %1153 = vmatpush2.msra.mxu0 0.0
    %1154 = vmatprep.subr.mxu0 0.0
    %1155 = vmatpush2.msra.mxu0 0.0
    %1156 = vmatprep.subr.mxu0 0.0
    %1157 = vmatpush2.msra.mxu0 0.0
    %1158 = vmatprep.mubr.f32.mxu0 0.0
    %1159 = vmatmul.mubr.f32.gmra.mxu0 %v1092
    %v1160 = vpop.f32.mrf.mxu0
    %v1161 = vadd.f32 %v1085, %v1160
    %v1162 = vpop.f32.mrf.mxu0
    %v1163 = vadd.f32 %v1089, %v1162
    %1164 = vdwg.mxu0
    %v1165 = vadd.f32 %v1062, %v1161
    %v1166 = vxor.u32 %v1165, 2147483648
    %v1167 = vmul.f32 %v1166, 1.442695
    %v1168 = vpow.pop %v1167
    %v1169 = vadd.f32 %v1168, 1.0
    %v1170 = vrcp.pop %v1169
    %v1171 = vmul.f32 1.0, %v1170
    %v1172 = vmul.f32 %v1171, %v1163
    %v1173 = vadd.f32 %v1063, %v1172
    %v1174 = vtanh.pop %v1173
    %v1175 = vsub.f32 1.0, %v1171
    %1177 = vrot.lane.b32.xlu0 %v1174, 64
    %v1178 = vpop.permute.xlu0 %1177
    %v1180 = vmul.f32 %v1175, %v1178
    %v1181 = vmul.f32 %v1171, %v1047
    %v1182 = vadd.f32 %v1180, %v1181
    %1184 = vrot.lane.b32.xlu0 %v1182, 64
    %v1185 = vpop.permute.xlu0 %1184
    %1187 = vst.msk [vmem:[%s778] sm:$0xff] %vm497, %v1185
    %1188 = vst.msk [vmem:[%s776] sm:$0xff] %vm500, %v1185
    %s1189 = smul.addr %s507, 8
    %s1190 = scalar_lea.vmem [#allocation2], %s1189
    %v1191 = vld [vmem:[%s1190] sm:$0xff]
    %v1192 = vld [vmem:[%s1190 + $0x8] sm:$0xff]
    %s1193 = smul.addr %s502, 8
    %s1194 = scalar_lea.vmem [#allocation3], %s1193
    %v1195 = vld [vmem:[%s1194] sm:$0xff]
    %v1196 = vld [vmem:[%s1194 + $0x8] sm:$0xff]
    %v1197 = vadd.f32 %v1191, %v1195
    %v1198 = vadd.f32 %v1192, %v1196
    %v1199 = vld [vmem:[#allocation4] sm:$0xff]
    %v1200 = vld [vmem:[#allocation4 + $0x8] sm:$0xff]
    %v1201 = vld [vmem:[#allocation4 + $0x10] sm:$0xff]
    %v1202 = vld [vmem:[#allocation4 + $0x18] sm:$0xff]
    %v1203 = vld [vmem:[#allocation4 + $0x20] sm:$0xff]
    %v1204 = vld [vmem:[#allocation4 + $0x28] sm:$0xff]
    %v1205 = vld [vmem:[#allocation4 + $0x30] sm:$0xff]
    %v1206 = vld [vmem:[#allocation4 + $0x38] sm:$0xff]
    %v1207 = vld [vmem:[#allocation4 + $0x40] sm:$0xff]
    %v1208 = vld [vmem:[#allocation4 + $0x48] sm:$0xff]
    %v1209 = vld [vmem:[#allocation4 + $0x50] sm:$0xff]
    %v1210 = vld [vmem:[#allocation4 + $0x58] sm:$0xff]
    %v1211 = vld [vmem:[#allocation4 + $0x60] sm:$0xff]
    %v1212 = vld [vmem:[#allocation4 + $0x68] sm:$0xff]
    %v1213 = vld [vmem:[#allocation4 + $0x70] sm:$0xff]
    %v1214 = vld [vmem:[#allocation4 + $0x78] sm:$0xff]
    %v1215 = vld [vmem:[%s6] sm:$0x3]
    %v1217 = vlaneseq
    %v1218 = vshrl.u32 %v1217, 7
    %v1219 = vsub.s32 0, %v1218
    %v1220 = vrot.slane %v1215, %v1219
    %v1221 = vlaneseq
    %v1222 = vshrl.u32 %v1221, 7
    %v1223 = vsub.s32 1, %v1222
    %v1224 = vrot.slane %v1215, %v1223
    %v1227 = vsel %vm202, %v1185, 0
    %1229 = vmatprep.subr.mxu0 0.0
    %1230 = vmatpush1.msra.mxu0 0.0
    %1231 = vmatprep.subr.mxu0 0.0
    %1232 = vmatpush1.msra.mxu0 0.0
    %1233 = vmatprep.subr.mxu0 0.0
    %1234 = vmatpush1.msra.mxu0 0.0
    %1235 = vmatprep.subr.mxu0 0.0
    %1236 = vmatpush1.msra.mxu0 0.0
    %1237 = vmatprep.subr.mxu0 0.0
    %1238 = vmatpush1.msra.mxu0 0.0
    %1239 = vmatprep.subr.mxu0 0.0
    %1240 = vmatpush1.msra.mxu0 0.0
    %1241 = vmatprep.subr.mxu0 0.0
    %1242 = vmatpush1.msra.mxu0 0.0
    %1243 = vmatprep.subr.mxu0 0.0
    %1244 = vmatpush1.msra.mxu0 0.0
    %1245 = vmatprep.subr.mxu0 %v1214
    %1246 = vmatpush1.msra.mxu0 %v1213
    %1247 = vmatprep.subr.mxu0 %v1212
    %1248 = vmatpush1.msra.mxu0 %v1211
    %1249 = vmatprep.subr.mxu0 %v1210
    %1250 = vmatpush1.msra.mxu0 %v1209
    %1251 = vmatprep.subr.mxu0 %v1208
    %1252 = vmatpush1.msra.mxu0 %v1207
    %1253 = vmatprep.subr.mxu0 %v1206
    %1254 = vmatpush1.msra.mxu0 %v1205
    %1255 = vmatprep.subr.mxu0 %v1204
    %1256 = vmatpush1.msra.mxu0 %v1203
    %1257 = vmatprep.subr.mxu0 %v1202
    %1258 = vmatpush1.msra.mxu0 %v1201
    %1259 = vmatprep.subr.mxu0 %v1200
    %1260 = vmatpush1.msra.mxu0 %v1199
    %1261 = vmatprep.subr.mxu0 0.0
    %1262 = vmatpush2.msra.mxu0 0.0
    %1263 = vmatprep.subr.mxu0 0.0
    %1264 = vmatpush2.msra.mxu0 0.0
    %1265 = vmatprep.subr.mxu0 0.0
    %1266 = vmatpush2.msra.mxu0 0.0
    %1267 = vmatprep.subr.mxu0 0.0
    %1268 = vmatpush2.msra.mxu0 0.0
    %1269 = vmatprep.subr.mxu0 0.0
    %1270 = vmatpush2.msra.mxu0 0.0
    %1271 = vmatprep.subr.mxu0 0.0
    %1272 = vmatpush2.msra.mxu0 0.0
    %1273 = vmatprep.subr.mxu0 0.0
    %1274 = vmatpush2.msra.mxu0 0.0
    %1275 = vmatprep.subr.mxu0 0.0
    %1276 = vmatpush2.msra.mxu0 0.0
    %1277 = vmatprep.subr.mxu0 0.0
    %1278 = vmatpush2.msra.mxu0 0.0
    %1279 = vmatprep.subr.mxu0 0.0
    %1280 = vmatpush2.msra.mxu0 0.0
    %1281 = vmatprep.subr.mxu0 0.0
    %1282 = vmatpush2.msra.mxu0 0.0
    %1283 = vmatprep.subr.mxu0 0.0
    %1284 = vmatpush2.msra.mxu0 0.0
    %1285 = vmatprep.subr.mxu0 0.0
    %1286 = vmatpush2.msra.mxu0 0.0
    %1287 = vmatprep.subr.mxu0 0.0
    %1288 = vmatpush2.msra.mxu0 0.0
    %1289 = vmatprep.subr.mxu0 0.0
    %1290 = vmatpush2.msra.mxu0 0.0
    %1291 = vmatprep.subr.mxu0 0.0
    %1292 = vmatpush2.msra.mxu0 0.0
    %1293 = vmatprep.mubr.f32.mxu0 0.0
    %1294 = vmatmul.mubr.f32.gmra.mxu0 %v1227
    %v1295 = vpop.f32.mrf.mxu0
    %v1296 = vadd.f32 %v1220, %v1295
    %v1297 = vpop.f32.mrf.mxu0
    %v1298 = vadd.f32 %v1224, %v1297
    %1299 = vdwg.mxu0
    %v1300 = vadd.f32 %v1197, %v1296
    %v1301 = vxor.u32 %v1300, 2147483648
    %v1302 = vmul.f32 %v1301, 1.442695
    %v1303 = vpow.pop %v1302
    %v1304 = vadd.f32 %v1303, 1.0
    %v1305 = vrcp.pop %v1304
    %v1306 = vmul.f32 1.0, %v1305
    %v1307 = vmul.f32 %v1306, %v1298
    %v1308 = vadd.f32 %v1198, %v1307
    %v1309 = vtanh.pop %v1308
    %v1310 = vsub.f32 1.0, %v1306
    %1312 = vrot.lane.b32.xlu0 %v1309, 64
    %v1313 = vpop.permute.xlu0 %1312
    %v1315 = vmul.f32 %v1310, %v1313
    %v1316 = vmul.f32 %v1306, %v1182
    %v1317 = vadd.f32 %v1315, %v1316
    %1319 = vrot.lane.b32.xlu0 %v1317, 64
    %v1320 = vpop.permute.xlu0 %1319
    %1322 = vst.msk [vmem:[%s639] sm:$0xff] %vm497, %v1320
    %1323 = vst.msk [vmem:[%s637] sm:$0xff] %vm500, %v1320
    %s1324 = smul.addr %s366, 8
    %s1325 = scalar_lea.vmem [#allocation2], %s1324
    %v1326 = vld [vmem:[%s1325] sm:$0xff]
    %v1327 = vld [vmem:[%s1325 + $0x8] sm:$0xff]
    %s1328 = smul.addr %s361, 8
    %s1329 = scalar_lea.vmem [#allocation3], %s1328
    %v1330 = vld [vmem:[%s1329] sm:$0xff]
    %v1331 = vld [vmem:[%s1329 + $0x8] sm:$0xff]
    %v1332 = vadd.f32 %v1326, %v1330
    %v1333 = vadd.f32 %v1327, %v1331
    %v1334 = vld [vmem:[#allocation4] sm:$0xff]
    %v1335 = vld [vmem:[#allocation4 + $0x8] sm:$0xff]
    %v1336 = vld [vmem:[#allocation4 + $0x10] sm:$0xff]
    %v1337 = vld [vmem:[#allocation4 + $0x18] sm:$0xff]
    %v1338 = vld [vmem:[#allocation4 + $0x20] sm:$0xff]
    %v1339 = vld [vmem:[#allocation4 + $0x28] sm:$0xff]
    %v1340 = vld [vmem:[#allocation4 + $0x30] sm:$0xff]
    %v1341 = vld [vmem:[#allocation4 + $0x38] sm:$0xff]
    %v1342 = vld [vmem:[#allocation4 + $0x40] sm:$0xff]
    %v1343 = vld [vmem:[#allocation4 + $0x48] sm:$0xff]
    %v1344 = vld [vmem:[#allocation4 + $0x50] sm:$0xff]
    %v1345 = vld [vmem:[#allocation4 + $0x58] sm:$0xff]
    %v1346 = vld [vmem:[#allocation4 + $0x60] sm:$0xff]
    %v1347 = vld [vmem:[#allocation4 + $0x68] sm:$0xff]
    %v1348 = vld [vmem:[#allocation4 + $0x70] sm:$0xff]
    %v1349 = vld [vmem:[#allocation4 + $0x78] sm:$0xff]
    %v1350 = vld [vmem:[%s6] sm:$0x3]
    %v1352 = vlaneseq
    %v1353 = vshrl.u32 %v1352, 7
    %v1354 = vsub.s32 0, %v1353
    %v1355 = vrot.slane %v1350, %v1354
    %v1356 = vlaneseq
    %v1357 = vshrl.u32 %v1356, 7
    %v1358 = vsub.s32 1, %v1357
    %v1359 = vrot.slane %v1350, %v1358
    %v1362 = vsel %vm202, %v1320, 0
    %1364 = vmatprep.subr.mxu0 0.0
    %1365 = vmatpush1.msra.mxu0 0.0
    %1366 = vmatprep.subr.mxu0 0.0
    %1367 = vmatpush1.msra.mxu0 0.0
    %1368 = vmatprep.subr.mxu0 0.0
    %1369 = vmatpush1.msra.mxu0 0.0
    %1370 = vmatprep.subr.mxu0 0.0
    %1371 = vmatpush1.msra.mxu0 0.0
    %1372 = vmatprep.subr.mxu0 0.0
    %1373 = vmatpush1.msra.mxu0 0.0
    %1374 = vmatprep.subr.mxu0 0.0
    %1375 = vmatpush1.msra.mxu0 0.0
    %1376 = vmatprep.subr.mxu0 0.0
    %1377 = vmatpush1.msra.mxu0 0.0
    %1378 = vmatprep.subr.mxu0 0.0
    %1379 = vmatpush1.msra.mxu0 0.0
    %1380 = vmatprep.subr.mxu0 %v1349
    %1381 = vmatpush1.msra.mxu0 %v1348
    %1382 = vmatprep.subr.mxu0 %v1347
    %1383 = vmatpush1.msra.mxu0 %v1346
    %1384 = vmatprep.subr.mxu0 %v1345
    %1385 = vmatpush1.msra.mxu0 %v1344
    %1386 = vmatprep.subr.mxu0 %v1343
    %1387 = vmatpush1.msra.mxu0 %v1342
    %1388 = vmatprep.subr.mxu0 %v1341
    %1389 = vmatpush1.msra.mxu0 %v1340
    %1390 = vmatprep.subr.mxu0 %v1339
    %1391 = vmatpush1.msra.mxu0 %v1338
    %1392 = vmatprep.subr.mxu0 %v1337
    %1393 = vmatpush1.msra.mxu0 %v1336
    %1394 = vmatprep.subr.mxu0 %v1335
    %1395 = vmatpush1.msra.mxu0 %v1334
    %1396 = vmatprep.subr.mxu0 0.0
    %1397 = vmatpush2.msra.mxu0 0.0
    %1398 = vmatprep.subr.mxu0 0.0
    %1399 = vmatpush2.msra.mxu0 0.0
    %1400 = vmatprep.subr.mxu0 0.0
    %1401 = vmatpush2.msra.mxu0 0.0
    %1402 = vmatprep.subr.mxu0 0.0
    %1403 = vmatpush2.msra.mxu0 0.0
    %1404 = vmatprep.subr.mxu0 0.0
    %1405 = vmatpush2.msra.mxu0 0.0
    %1406 = vmatprep.subr.mxu0 0.0
    %1407 = vmatpush2.msra.mxu0 0.0
    %1408 = vmatprep.subr.mxu0 0.0
    %1409 = vmatpush2.msra.mxu0 0.0
    %1410 = vmatprep.subr.mxu0 0.0
    %1411 = vmatpush2.msra.mxu0 0.0
    %1412 = vmatprep.subr.mxu0 0.0
    %1413 = vmatpush2.msra.mxu0 0.0
    %1414 = vmatprep.subr.mxu0 0.0
    %1415 = vmatpush2.msra.mxu0 0.0
    %1416 = vmatprep.subr.mxu0 0.0
    %1417 = vmatpush2.msra.mxu0 0.0
    %1418 = vmatprep.subr.mxu0 0.0
    %1419 = vmatpush2.msra.mxu0 0.0
    %1420 = vmatprep.subr.mxu0 0.0
    %1421 = vmatpush2.msra.mxu0 0.0
    %1422 = vmatprep.subr.mxu0 0.0
    %1423 = vmatpush2.msra.mxu0 0.0
    %1424 = vmatprep.subr.mxu0 0.0
    %1425 = vmatpush2.msra.mxu0 0.0
    %1426 = vmatprep.subr.mxu0 0.0
    %1427 = vmatpush2.msra.mxu0 0.0
    %1428 = vmatprep.mubr.f32.mxu0 0.0
    %1429 = vmatmul.mubr.f32.gmra.mxu0 %v1362
    %v1430 = vpop.f32.mrf.mxu0
    %v1431 = vadd.f32 %v1355, %v1430
    %v1432 = vpop.f32.mrf.mxu0
    %v1433 = vadd.f32 %v1359, %v1432
    %1434 = vdwg.mxu0
    %v1435 = vadd.f32 %v1332, %v1431
    %v1436 = vxor.u32 %v1435, 2147483648
    %v1437 = vmul.f32 %v1436, 1.442695
    %v1438 = vpow.pop %v1437
    %v1439 = vadd.f32 %v1438, 1.0
    %v1440 = vrcp.pop %v1439
    %v1441 = vmul.f32 1.0, %v1440
    %v1442 = vmul.f32 %v1441, %v1433
    %v1443 = vadd.f32 %v1333, %v1442
    %v1444 = vtanh.pop %v1443
    %v1445 = vsub.f32 1.0, %v1441
    %1447 = vrot.lane.b32.xlu0 %v1444, 64
    %v1448 = vpop.permute.xlu0 %1447
    %v1450 = vmul.f32 %v1445, %v1448
    %v1451 = vmul.f32 %v1441, %v1317
    %v1452 = vadd.f32 %v1450, %v1451
    %1454 = vrot.lane.b32.xlu0 %v1452, 64
    %v1455 = vpop.permute.xlu0 %1454
    %1457 = vst.msk [vmem:[%s499] sm:$0xff] %vm497, %v1455
    %1458 = vst.msk [vmem:[#allocation7] sm:$0xff] %vm500, %v1455
    // Predicated region
    $region34: #{tpu_custom_call.1} parent=1 // pred_check
      _
    $region35: #{tpu_custom_call.1} parent=1 // pred_check_branch
      %1460 = sbr.rel (0) target = $region37
    $region36: #{tpu_custom_call.1} parent=1 // pred_region
      %s1462 = ssub.s32 1024, 1024
      %1463 = vsyncadd [#allocation6], %s1462
      %s1464 = sshll.u32 [#allocation7], 4
      %s1465 = int_to_ptr.vmem [resolvable:$true] %s1464
      %1470 = dma.vmem_to_hbm [thread:$0]  %s1465, 1024, %s7, [#allocation6], 128, 128, 8
    $region37: #{tpu_custom_call.1} parent=1 // pred_fallthru
      _
    // Predicated region
    $region38: #{tpu_custom_call.1} parent=1 // pred_check
      _
    $region39: #{tpu_custom_call.1} parent=1 // pred_check_branch
      %1472 = sbr.rel (0) target = $region41
    $region40: #{tpu_custom_call.1} parent=1 // pred_region
      %1473 = dma.done [#allocation6], 1024
    $region41: #{tpu_custom_call.1} parent=1 // pred_fallthru
      _
    %1474 = vsyncpa [#allocation5], 1
    %1475 = vsyncpa [#allocation6], 1

</llo_original>
